<compile_context>
chip_gen: v5e
topology: v5e:2x2
jax: 0.10.0
libtpu: 0.0.40
codegen_flags: <defaults>
</compile_context>

<pallas_src>
import functools
import math

import jax
import jax.numpy as jnp
import numpy as np
from jax import lax
from jax.experimental import pallas as pl
from jax.experimental.pallas import tpu as pltpu


# --------------------------------------------------------------------------
# Kernel: one grid step processes BB images packed as (BB*A, 5*SSp) rows and
# accumulates the six unscaled partial loss sums into a resident (1,1,128)
# output block.  Lanes: [lx, ly, lw, lh, lconf, lhand, 0...].
# --------------------------------------------------------------------------
def _region_loss_kernel(pred_ref, meta_ref, acc_ref, *, S, SS, SSp,
                        object_scale, no_object_scale, sil_thresh):
    R = pred_ref.shape[0]                                   # BB * A rows

    # Lane-aligned component slices of the packed (R, 5*SSp) prediction block.
    rx = pred_ref[:, 0 * SSp:1 * SSp].astype(jnp.float32)
    ry = pred_ref[:, 1 * SSp:2 * SSp].astype(jnp.float32)
    rw = pred_ref[:, 2 * SSp:3 * SSp].astype(jnp.float32)
    rh = pred_ref[:, 3 * SSp:4 * SSp].astype(jnp.float32)
    rc = pred_ref[:, 4 * SSp:5 * SSp].astype(jnp.float32)

    # sigmoid(x) = 0.5 * tanh(0.5*x) + 0.5   (single EUP op per pass)
    px = 0.5 * jnp.tanh(0.5 * rx) + 0.5
    py = 0.5 * jnp.tanh(0.5 * ry) + 0.5
    pconf = 0.5 * jnp.tanh(0.5 * rc) + 0.5

    m = meta_ref[...]                                       # (R, 16)
    gx = m[:, 0:1]
    gy = m[:, 1:2]
    gw = m[:, 2:3]
    gh = m[:, 3:4]
    sb = m[:, 4:5]            # best spatial index gj*S + gi (integer-valued f32)
    tx = m[:, 5:6]
    ty = m[:, 6:7]
    tw = m[:, 7:8]
    th = m[:, 8:9]
    aw = m[:, 9:10]           # anchor width of this row's anchor
    ah = m[:, 10:11]
    is_best = m[:, 11:12] > 0.0    # this row holds the best anchor of its image
    hand_sq = m[:, 12:13]          # per-image hand-loss partial (anchor-0 rows)
    valid = m[:, 13:14] > 0.0      # real (non-padded) image

    # Grid col/row maps generated in-kernel (no resident constant input).
    lane_i = lax.broadcasted_iota(jnp.int32, (R, SSp), 1)
    lanef = lane_i.astype(jnp.float32)
    rowf = jnp.floor((lanef + 0.5) * (1.0 / S))             # gj of each lane
    colf = lanef - rowf * S                                 # gi of each lane
    lane_ok = lane_i < SS                                   # real spatial lane

    # Best-cell mask: exactly one element per valid image (sb is clamped < SS).
    bc = (lanef == sb) & is_best

    # Decoded prediction boxes (only needed for the confidence terms).
    bx = px + colf
    by = py + rowf
    bw = jnp.exp(rw) * aw
    bh = jnp.exp(rh) * ah

    mnx = jnp.minimum(bx - 0.5 * bw, gx - 0.5 * gw)
    mxx = jnp.maximum(bx + 0.5 * bw, gx + 0.5 * gw)
    mny = jnp.minimum(by - 0.5 * bh, gy - 0.5 * gh)
    mxy = jnp.maximum(by + 0.5 * bh, gy + 0.5 * gh)
    cw = bw + gw - (mxx - mnx)
    ch = bh + gh - (mxy - mny)
    carea = jnp.where((cw <= 0.0) | (ch <= 0.0), 0.0, cw * ch)
    uarea = bw * bh + gw * gh - carea                       # > 0 for real rows

    # Coordinate losses: target (tx,ty,tw,th) at the best cell, defaults
    # (0.5, 0.5, 0, 0) elsewhere (seen < 12800 => coord_mask == 1).  Padded
    # lanes / images hold pred == 0 so they contribute exactly 0.
    lx = jnp.sum((px - jnp.where(bc, tx, 0.5)) ** 2)
    ly = jnp.sum((py - jnp.where(bc, ty, 0.5)) ** 2)
    lw = jnp.sum((rw - jnp.where(bc, tw, 0.0)) ** 2)
    lh = jnp.sum((rh - jnp.where(bc, th, 0.0)) ** 2)

    # Confidence loss, no-object part: iou <= sil_thresh  <=>
    # carea <= sil_thresh * uarea (uarea > 0), excluding the best cell and any
    # padded lanes / padded images.
    noobj_mask = (lane_ok & valid &
                  jnp.logical_not(carea > sil_thresh * uarea) &
                  jnp.logical_not(bc))
    noobj = jnp.sum(jnp.where(noobj_mask, pconf * pconf, 0.0))

    # Object part: (pconf - iou)^2 at the single best cell of each image.
    # (pconf - carea/uarea)^2 == ((pconf*uarea - carea)/uarea)^2 -> two masked
    # lane reductions + one tiny per-row divide (no full-array divide).
    num_r = jnp.sum(jnp.where(bc, pconf * uarea - carea, 0.0),
                    axis=1, keepdims=True)                  # (R, 1)
    den_r = jnp.sum(jnp.where(bc, uarea, 0.0), axis=1, keepdims=True)
    den_r = jnp.where(is_best, den_r, 1.0)
    obj = jnp.sum(jnp.where(is_best, (num_r / den_r) ** 2, 0.0))

    lconf = no_object_scale * noobj + object_scale * obj
    lhand = jnp.sum(hand_sq)

    lane = lax.broadcasted_iota(jnp.int32, (1, 1, 128), 2)
    vec = (jnp.where(lane == 0, lx, 0.0) + jnp.where(lane == 1, ly, 0.0) +
           jnp.where(lane == 2, lw, 0.0) + jnp.where(lane == 3, lh, 0.0) +
           jnp.where(lane == 4, lconf, 0.0) + jnp.where(lane == 5, lhand, 0.0))

    @pl.when(pl.program_id(1) == 0)
    def _init():
        acc_ref[...] = vec

    @pl.when(pl.program_id(1) != 0)
    def _accumulate():
        acc_ref[...] += vec


# --------------------------------------------------------------------------
# Wrapper-side glue: tiny per-(image, anchor) metadata rows.
# --------------------------------------------------------------------------
def _build_meta(target, hand_sq, anchors, S, A, B_pad):
    """(B_pad*A, 16) rows: gt box, best-cell index, targets, anchor wh, flags."""
    B = target.shape[0]
    t = target.astype(jnp.float32)
    gx = t[:, 0] * S
    gy = t[:, 1] * S
    gw = t[:, 2] * S
    gh = t[:, 3] * S
    # int() truncation in the torch code (targets >= 0); clamp defends against
    # coordinate == 1.0 producing an out-of-grid best cell (NaN guard).
    gi = jnp.clip(jnp.floor(gx), 0.0, S - 1.0)
    gj = jnp.clip(jnp.floor(gy), 0.0, S - 1.0)

    aw = jnp.asarray(np.asarray(anchors[0::2], np.float32))     # (A,)
    ah = jnp.asarray(np.asarray(anchors[1::2], np.float32))
    inter = (jnp.minimum(aw[None, :], gw[:, None]) *
             jnp.minimum(ah[None, :], gh[:, None]))
    union = aw[None, :] * ah[None, :] + (gw * gh)[:, None] - inter
    best = jnp.argmax(inter / union, axis=1)                    # (B,)
    aw_b = aw[best]
    ah_b = ah[best]

    tx = gx - gi
    ty = gy - gj
    tw = jnp.log(gw / aw_b)
    th = jnp.log(gh / ah_b)
    sb = gj * S + gi

    img = jnp.stack([gx, gy, gw, gh, sb, tx, ty, tw, th], axis=1)   # (B, 9)
    img = jnp.broadcast_to(img[:, None, :], (B, A, 9))
    aw_r = jnp.broadcast_to(aw[None, :, None], (B, A, 1))
    ah_r = jnp.broadcast_to(ah[None, :, None], (B, A, 1))
    is_best = (jnp.arange(A)[None, :] == best[:, None])
    is_best = is_best.astype(jnp.float32)[:, :, None]               # (B, A, 1)
    hand = jnp.where(jnp.arange(A)[None, :] == 0,
                     hand_sq[:, None], 0.0).astype(jnp.float32)[:, :, None]
    valid = jnp.ones((B, A, 1), jnp.float32)
    pad = jnp.zeros((B, A, 2), jnp.float32)
    meta = jnp.concatenate([img, aw_r, ah_r, is_best, hand, valid, pad],
                           axis=2)                                  # (B, A, 16)
    if B_pad > B:
        meta = jnp.concatenate(
            [meta, jnp.zeros((B_pad - B, A, 16), jnp.float32)], axis=0)
    return meta.reshape(B_pad * A, 16)


def _num_tensorcore_splits():
    """2 partial accumulators on dual-TensorCore chips (v7x), else 1."""
    try:
        kind = jax.devices()[0].device_kind.lower()
    except Exception:
        return 1
    return 2 if "7" in kind else 1


# --------------------------------------------------------------------------
# Wrapper == RegionLoss_1Class_reg.forward(pred_list, target, uvd_gt, True)
# --------------------------------------------------------------------------
def region_loss_forward(pred, pred_uvd, target, uvd_gt, *, anchors,
                        object_scale, no_object_scale, coord_scale,
                        sil_thresh):
    B, C, H, W = pred.shape
    assert H == W, "square feature map assumed (as in the reference code)"
    S = H
    A = len(anchors) // 2
    assert C == A * 5
    SS = S * S
    SSp = ((SS + 127) // 128) * 128              # lane-pad spatial dim

    # ---- tiling -----------------------------------------------------------
    NSPLIT = _num_tensorcore_splits() if B >= 2 else 1
    itemsize = jnp.dtype(pred.dtype).itemsize
    per_img_in = A * 5 * SSp * itemsize + A * 16 * 4
    per_img_f32 = A * 5 * SSp * 4
    budget = 24 << 20                            # VMEM budget for one step
    bb_cap = max(1, budget // (2 * per_img_in + 3 * per_img_f32))
    row_mult = 8 // math.gcd(A, 8)               # BB*A must be a multiple of 8
    bb_cap = max(row_mult, (bb_cap // row_mult) * row_mult)
    NSTEPS = max(1, -(-B // (NSPLIT * bb_cap)))  # steps per split
    BB = -(-B // (NSPLIT * NSTEPS))              # images per step
    BB = -(-BB // row_mult) * row_mult
    B_pad = NSPLIT * NSTEPS * BB

    # ---- kernel inputs ------------------------------------------------------
    predv = pred.reshape(B, A, 5, SS)            # free view of NCHW
    if SSp != SS:
        predv = jnp.pad(predv, ((0, 0), (0, 0), (0, 0), (0, SSp - SS)))
    if B_pad != B:
        predv = jnp.concatenate(
            [predv, jnp.zeros((B_pad - B, A, 5, SSp), predv.dtype)], axis=0)
    pred2 = predv.reshape(B_pad * A, 5 * SSp)

    hand_sq = jnp.sum(
        (uvd_gt.astype(jnp.float32).reshape(B, -1) -
         pred_uvd.astype(jnp.float32).reshape(B, -1)) ** 2, axis=1)
    meta = _build_meta(target, hand_sq, anchors, S, A, B_pad)

    kernel = functools.partial(
        _region_loss_kernel, S=S, SS=SS, SSp=SSp,
        object_scale=float(object_scale),
        no_object_scale=float(no_object_scale),
        sil_thresh=float(sil_thresh))

    rows = BB * A
    block_in_bytes = rows * 5 * SSp * itemsize + rows * 16 * 4
    vmem_limit = int(min(48 << 20,
                         max(16 << 20,
                             2 * block_in_bytes + 4 * rows * 5 * SSp * 4
                             + (4 << 20))))

    def in_map(c, b):
        return (c * NSTEPS + b, 0)

    out = pl.pallas_call(
        kernel,
        out_shape=jax.ShapeDtypeStruct((NSPLIT, 1, 128), jnp.float32),
        grid=(NSPLIT, NSTEPS),
        in_specs=[
            pl.BlockSpec((rows, 5 * SSp), in_map),
            pl.BlockSpec((rows, 16), in_map),
        ],
        out_specs=pl.BlockSpec((1, 1, 128), lambda c, b: (c, 0, 0)),
        compiler_params=pltpu.CompilerParams(
            dimension_semantics=("parallel", "arbitrary"),
            vmem_limit_bytes=vmem_limit),
    )(pred2, meta)

    res = out[0, 0] if NSPLIT == 1 else jnp.sum(out, axis=(0, 1))   # (128,)
    loss_x = coord_scale * res[0] / 2.0
    loss_y = coord_scale * res[1] / 2.0
    loss_w = coord_scale * res[2] / 2.0
    loss_h = coord_scale * res[3] / 2.0
    loss_conf = res[4] / 2.0
    loss_hand = res[5] / 2.0
    loss = loss_x + loss_y + loss_w + loss_h + loss_conf + loss_hand
    return loss, loss_x, loss_y, loss_w, loss_h, loss_conf, loss_hand


# --------------------------------------------------------------------------
# Pure-JAX reference (mirrors the PyTorch forward, seen = 0).
# --------------------------------------------------------------------------
def reference_forward(pred, pred_uvd, target, uvd_gt, *, anchors, object_scale,
                      no_object_scale, coord_scale, sil_thresh):
    B, C, H, W = pred.shape
    S = H
    A = len(anchors) // 2
    p = pred.astype(jnp.float32).reshape(B, A, 5, S, S)
    sx = jax.nn.sigmoid(p[:, :, 0])
    sy = jax.nn.sigmoid(p[:, :, 1])
    rw = p[:, :, 2]
    rh = p[:, :, 3]
    pconf = jax.nn.sigmoid(p[:, :, 4])

    aw = jnp.asarray(anchors[0::2], jnp.float32)
    ah = jnp.asarray(anchors[1::2], jnp.float32)
    gridx = jnp.arange(S, dtype=jnp.float32)[None, None, None, :]
    gridy = jnp.arange(S, dtype=jnp.float32)[None, None, :, None]
    bx = sx + gridx
    by = sy + gridy
    bw = jnp.exp(rw) * aw[None, :, None, None]
    bh = jnp.exp(rh) * ah[None, :, None, None]

    tgt = target.astype(jnp.float32)
    gx = tgt[:, 0] * S
    gy = tgt[:, 1] * S
    gw = tgt[:, 2] * S
    gh = tgt[:, 3] * S
    gi = jnp.floor(gx).astype(jnp.int32)
    gj = jnp.floor(gy).astype(jnp.int32)

    e4 = lambda v: v[:, None, None, None]
    mnx = jnp.minimum(bx - 0.5 * bw, e4(gx - 0.5 * gw))
    mxx = jnp.maximum(bx + 0.5 * bw, e4(gx + 0.5 * gw))
    mny = jnp.minimum(by - 0.5 * bh, e4(gy - 0.5 * gh))
    mxy = jnp.maximum(by + 0.5 * bh, e4(gy + 0.5 * gh))
    cw = bw + e4(gw) - (mxx - mnx)
    ch = bh + e4(gh) - (mxy - mny)
    carea = jnp.where((cw <= 0) | (ch <= 0), 0.0, cw * ch)
    uarea = bw * bh + e4(gw * gh) - carea
    iou = carea / uarea

    inter_a = (jnp.minimum(aw[None, :], gw[:, None]) *
               jnp.minimum(ah[None, :], gh[:, None]))
    union_a = aw[None, :] * ah[None, :] + (gw * gh)[:, None] - inter_a
    best = jnp.argmax(inter_a / union_a, axis=1)
    aw_b = aw[best]
    ah_b = ah[best]

    anchor_idx = jnp.arange(A)[None, :, None, None]
    rowidx = jnp.arange(S)[None, None, :, None]
    colidx = jnp.arange(S)[None, None, None, :]
    best_cell = ((anchor_idx == best[:, None, None, None]) &
                 (rowidx == gj[:, None, None, None]) &
                 (colidx == gi[:, None, None, None]))

    conf_mask = jnp.where(iou > sil_thresh, 0.0, no_object_scale)
    conf_mask = jnp.where(best_cell, object_scale, conf_mask)
    conf_mask = jnp.sqrt(conf_mask)

    tconf = jnp.where(best_cell, iou, 0.0)
    tbx = jnp.where(best_cell, e4(gx - gi.astype(jnp.float32)), 0.5)
    tby = jnp.where(best_cell, e4(gy - gj.astype(jnp.float32)), 0.5)
    tbw = jnp.where(best_cell, e4(jnp.log(gw / aw_b)), 0.0)
    tbh = jnp.where(best_cell, e4(jnp.log(gh / ah_b)), 0.0)

    loss_x = coord_scale * jnp.sum((sx - tbx) ** 2) / 2.0
    loss_y = coord_scale * jnp.sum((sy - tby) ** 2) / 2.0
    loss_w = coord_scale * jnp.sum((rw - tbw) ** 2) / 2.0
    loss_h = coord_scale * jnp.sum((rh - tbh) ** 2) / 2.0
    loss_conf = jnp.sum((pconf * conf_mask - tconf * conf_mask) ** 2) / 2.0
    loss_hand = jnp.sum((uvd_gt.reshape(B, -1) - pred_uvd) ** 2) / 2.0
    loss = loss_x + loss_y + loss_w + loss_h + loss_conf + loss_hand
    return loss, loss_x, loss_y, loss_w, loss_h, loss_conf, loss_hand


if __name__ == "__main__":
    # Deterministic config ("conf" dict of the module) and small shapes.
    anchors = (0.57, 0.67, 1.87, 2.06, 3.34, 5.47, 7.88, 3.53, 9.77, 9.17)
    conf = dict(object_scale=5.0, no_object_scale=1.0, coord_scale=1.0,
                sil_thresh=0.6)
    B, S = 2, 16
    A = len(anchors) // 2

    key = jax.random.PRNGKey(0)
    k1, k2, k3, k4, k5 = jax.random.split(key, 5)
    pred = jax.random.normal(k1, (B, A * 5, S, S), dtype=jnp.float32)   # NCHW
    pred_uvd = 0.1 * jax.random.normal(k2, (B, 63), dtype=jnp.float32)  # 21*3
    uvd_gt = jax.random.uniform(k3, (B, 21, 3), dtype=jnp.float32)
    txy = jax.random.uniform(k4, (B, 2), minval=0.2, maxval=0.8)
    twh = jax.random.uniform(k5, (B, 2), minval=0.1, maxval=0.5)
    target = jnp.concatenate([txy, twh], axis=1).astype(jnp.float32)    # (B,4)

    outs = region_loss_forward(pred, pred_uvd, target, uvd_gt,
                               anchors=anchors, **conf)
    outs = jax.block_until_ready(outs)

    refs = reference_forward(pred, pred_uvd, target, uvd_gt,
                             anchors=anchors, **conf)
    for o, r in zip(outs, refs):
        np.testing.assert_allclose(np.asarray(o), np.asarray(r),
                                   rtol=2e-3, atol=1e-2)

    print("KERNEL_OK")
</pallas_src>

<mosaic_0001>
module attributes {stable_mosaic.version = 11 : i64} {
  func.func @_region_loss_kernel(%arg0: i32, %arg1: i32, %arg2: memref<40x1280xf32, #tpu.memory_space<vmem>>, %arg3: memref<40x16xf32, #tpu.memory_space<vmem>>, %arg4: memref<1x1x128xf32, #tpu.memory_space<vmem>>) attributes {dimension_semantics = [#tpu.dimension_semantics<parallel>, #tpu.dimension_semantics<arbitrary>], iteration_bounds = array<i64: 1, 1>, scalar_prefetch = 0 : i64, scratch_operands = 0 : i64, tpu.core_type = #tpu.core_type<tc>, window_params = [{transform_indices = @transform_0, window_bounds = array<i64: 40, 1280>}, {transform_indices = @transform_1, window_bounds = array<i64: 40, 16>}, {transform_indices = @transform_2, window_bounds = array<i64: 1, 1, 128>}]} {
    %c0 = arith.constant 0 : index
    %c0_0 = arith.constant 0 : index
    %0 = vector.load %arg2[%c0, %c0_0] : memref<40x1280xf32, #tpu.memory_space<vmem>>, vector<40x256xf32>
    %c0_1 = arith.constant 0 : index
    %c256 = arith.constant 256 : index
    %1 = vector.load %arg2[%c0_1, %c256] : memref<40x1280xf32, #tpu.memory_space<vmem>>, vector<40x256xf32>
    %c0_2 = arith.constant 0 : index
    %c512 = arith.constant 512 : index
    %2 = vector.load %arg2[%c0_2, %c512] : memref<40x1280xf32, #tpu.memory_space<vmem>>, vector<40x256xf32>
    %c0_3 = arith.constant 0 : index
    %c768 = arith.constant 768 : index
    %3 = vector.load %arg2[%c0_3, %c768] : memref<40x1280xf32, #tpu.memory_space<vmem>>, vector<40x256xf32>
    %c0_4 = arith.constant 0 : index
    %c1024 = arith.constant 1024 : index
    %4 = vector.load %arg2[%c0_4, %c1024] : memref<40x1280xf32, #tpu.memory_space<vmem>>, vector<40x256xf32>
    %cst = arith.constant 5.000000e-01 : f32
    %5 = vector.broadcast %cst : f32 to vector<40x256xf32>
    %6 = arith.mulf %5, %0 : vector<40x256xf32>
    %7 = math.tanh %6 : vector<40x256xf32>
    %cst_5 = arith.constant 5.000000e-01 : f32
    %8 = vector.broadcast %cst_5 : f32 to vector<40x256xf32>
    %9 = arith.mulf %8, %7 : vector<40x256xf32>
    %cst_6 = arith.constant 5.000000e-01 : f32
    %10 = vector.broadcast %cst_6 : f32 to vector<40x256xf32>
    %11 = arith.addf %9, %10 : vector<40x256xf32>
    %cst_7 = arith.constant 5.000000e-01 : f32
    %12 = vector.broadcast %cst_7 : f32 to vector<40x256xf32>
    %13 = arith.mulf %12, %1 : vector<40x256xf32>
    %14 = math.tanh %13 : vector<40x256xf32>
    %cst_8 = arith.constant 5.000000e-01 : f32
    %15 = vector.broadcast %cst_8 : f32 to vector<40x256xf32>
    %16 = arith.mulf %15, %14 : vector<40x256xf32>
    %cst_9 = arith.constant 5.000000e-01 : f32
    %17 = vector.broadcast %cst_9 : f32 to vector<40x256xf32>
    %18 = arith.addf %16, %17 : vector<40x256xf32>
    %cst_10 = arith.constant 5.000000e-01 : f32
    %19 = vector.broadcast %cst_10 : f32 to vector<40x256xf32>
    %20 = arith.mulf %19, %4 : vector<40x256xf32>
    %21 = math.tanh %20 : vector<40x256xf32>
    %cst_11 = arith.constant 5.000000e-01 : f32
    %22 = vector.broadcast %cst_11 : f32 to vector<40x256xf32>
    %23 = arith.mulf %22, %21 : vector<40x256xf32>
    %cst_12 = arith.constant 5.000000e-01 : f32
    %24 = vector.broadcast %cst_12 : f32 to vector<40x256xf32>
    %25 = arith.addf %23, %24 : vector<40x256xf32>
    %c0_13 = arith.constant 0 : index
    %c0_14 = arith.constant 0 : index
    %26 = vector.load %arg3[%c0_13, %c0_14] : memref<40x16xf32, #tpu.memory_space<vmem>>, vector<40x16xf32>
    %27 = vector.extract_strided_slice %26 {offsets = [0, 0], sizes = [40, 1], strides = [1, 1]} : vector<40x16xf32> to vector<40x1xf32>
    %28 = vector.extract_strided_slice %26 {offsets = [0, 1], sizes = [40, 1], strides = [1, 1]} : vector<40x16xf32> to vector<40x1xf32>
    %29 = vector.extract_strided_slice %26 {offsets = [0, 2], sizes = [40, 1], strides = [1, 1]} : vector<40x16xf32> to vector<40x1xf32>
    %30 = vector.extract_strided_slice %26 {offsets = [0, 3], sizes = [40, 1], strides = [1, 1]} : vector<40x16xf32> to vector<40x1xf32>
    %31 = vector.extract_strided_slice %26 {offsets = [0, 4], sizes = [40, 1], strides = [1, 1]} : vector<40x16xf32> to vector<40x1xf32>
    %32 = vector.extract_strided_slice %26 {offsets = [0, 5], sizes = [40, 1], strides = [1, 1]} : vector<40x16xf32> to vector<40x1xf32>
    %33 = vector.extract_strided_slice %26 {offsets = [0, 6], sizes = [40, 1], strides = [1, 1]} : vector<40x16xf32> to vector<40x1xf32>
    %34 = vector.extract_strided_slice %26 {offsets = [0, 7], sizes = [40, 1], strides = [1, 1]} : vector<40x16xf32> to vector<40x1xf32>
    %35 = vector.extract_strided_slice %26 {offsets = [0, 8], sizes = [40, 1], strides = [1, 1]} : vector<40x16xf32> to vector<40x1xf32>
    %36 = vector.extract_strided_slice %26 {offsets = [0, 9], sizes = [40, 1], strides = [1, 1]} : vector<40x16xf32> to vector<40x1xf32>
    %37 = vector.extract_strided_slice %26 {offsets = [0, 10], sizes = [40, 1], strides = [1, 1]} : vector<40x16xf32> to vector<40x1xf32>
    %38 = vector.extract_strided_slice %26 {offsets = [0, 11], sizes = [40, 1], strides = [1, 1]} : vector<40x16xf32> to vector<40x1xf32>
    %cst_15 = arith.constant 0.000000e+00 : f32
    %39 = vector.broadcast %cst_15 : f32 to vector<40x1xf32>
    %40 = arith.cmpf ogt, %38, %39 : vector<40x1xf32>
    %41 = vector.extract_strided_slice %26 {offsets = [0, 12], sizes = [40, 1], strides = [1, 1]} : vector<40x16xf32> to vector<40x1xf32>
    %42 = vector.extract_strided_slice %26 {offsets = [0, 13], sizes = [40, 1], strides = [1, 1]} : vector<40x16xf32> to vector<40x1xf32>
    %cst_16 = arith.constant 0.000000e+00 : f32
    %43 = vector.broadcast %cst_16 : f32 to vector<40x1xf32>
    %44 = arith.cmpf ogt, %42, %43 : vector<40x1xf32>
    %45 = tpu.iota {dimensions = array<i32: 1>} : vector<40x256xi32>
    %46 = arith.sitofp %45 : vector<40x256xi32> to vector<40x256xf32>
    %cst_17 = arith.constant 5.000000e-01 : f32
    %47 = vector.broadcast %cst_17 : f32 to vector<40x256xf32>
    %48 = arith.addf %46, %47 : vector<40x256xf32>
    %cst_18 = arith.constant 6.250000e-02 : f32
    %49 = vector.broadcast %cst_18 : f32 to vector<40x256xf32>
    %50 = arith.mulf %48, %49 : vector<40x256xf32>
    %51 = math.floor %50 : vector<40x256xf32>
    %cst_19 = arith.constant 1.600000e+01 : f32
    %52 = vector.broadcast %cst_19 : f32 to vector<40x256xf32>
    %53 = arith.mulf %51, %52 : vector<40x256xf32>
    %54 = arith.subf %46, %53 : vector<40x256xf32>
    %c256_i32 = arith.constant 256 : i32
    %55 = vector.broadcast %c256_i32 : i32 to vector<40x256xi32>
    %56 = arith.cmpi slt, %45, %55 : vector<40x256xi32>
    %57 = vector.broadcast %31 : vector<40x1xf32> to vector<40x256xf32>
    %58 = arith.cmpf oeq, %46, %57 : vector<40x256xf32>
    %59 = vector.broadcast %40 : vector<40x1xi1> to vector<40x256xi1>
    %60 = arith.andi %58, %59 : vector<40x256xi1>
    %61 = arith.addf %11, %54 : vector<40x256xf32>
    %62 = arith.addf %18, %51 : vector<40x256xf32>
    %63 = math.exp %2 : vector<40x256xf32>
    %64 = vector.broadcast %36 : vector<40x1xf32> to vector<40x256xf32>
    %65 = arith.mulf %63, %64 : vector<40x256xf32>
    %66 = math.exp %3 : vector<40x256xf32>
    %67 = vector.broadcast %37 : vector<40x1xf32> to vector<40x256xf32>
    %68 = arith.mulf %66, %67 : vector<40x256xf32>
    %cst_20 = arith.constant 5.000000e-01 : f32
    %69 = vector.broadcast %cst_20 : f32 to vector<40x256xf32>
    %70 = arith.mulf %69, %65 : vector<40x256xf32>
    %71 = arith.subf %61, %70 : vector<40x256xf32>
    %cst_21 = arith.constant 5.000000e-01 : f32
    %72 = vector.broadcast %cst_21 : f32 to vector<40x1xf32>
    %73 = arith.mulf %72, %29 : vector<40x1xf32>
    %74 = arith.subf %27, %73 : vector<40x1xf32>
    %75 = vector.broadcast %74 : vector<40x1xf32> to vector<40x256xf32>
    %76 = arith.minimumf %71, %75 : vector<40x256xf32>
    %cst_22 = arith.constant 5.000000e-01 : f32
    %77 = vector.broadcast %cst_22 : f32 to vector<40x256xf32>
    %78 = arith.mulf %77, %65 : vector<40x256xf32>
    %79 = arith.addf %61, %78 : vector<40x256xf32>
    %cst_23 = arith.constant 5.000000e-01 : f32
    %80 = vector.broadcast %cst_23 : f32 to vector<40x1xf32>
    %81 = arith.mulf %80, %29 : vector<40x1xf32>
    %82 = arith.addf %27, %81 : vector<40x1xf32>
    %83 = vector.broadcast %82 : vector<40x1xf32> to vector<40x256xf32>
    %84 = arith.maximumf %79, %83 : vector<40x256xf32>
    %cst_24 = arith.constant 5.000000e-01 : f32
    %85 = vector.broadcast %cst_24 : f32 to vector<40x256xf32>
    %86 = arith.mulf %85, %68 : vector<40x256xf32>
    %87 = arith.subf %62, %86 : vector<40x256xf32>
    %cst_25 = arith.constant 5.000000e-01 : f32
    %88 = vector.broadcast %cst_25 : f32 to vector<40x1xf32>
    %89 = arith.mulf %88, %30 : vector<40x1xf32>
    %90 = arith.subf %28, %89 : vector<40x1xf32>
    %91 = vector.broadcast %90 : vector<40x1xf32> to vector<40x256xf32>
    %92 = arith.minimumf %87, %91 : vector<40x256xf32>
    %cst_26 = arith.constant 5.000000e-01 : f32
    %93 = vector.broadcast %cst_26 : f32 to vector<40x256xf32>
    %94 = arith.mulf %93, %68 : vector<40x256xf32>
    %95 = arith.addf %62, %94 : vector<40x256xf32>
    %cst_27 = arith.constant 5.000000e-01 : f32
    %96 = vector.broadcast %cst_27 : f32 to vector<40x1xf32>
    %97 = arith.mulf %96, %30 : vector<40x1xf32>
    %98 = arith.addf %28, %97 : vector<40x1xf32>
    %99 = vector.broadcast %98 : vector<40x1xf32> to vector<40x256xf32>
    %100 = arith.maximumf %95, %99 : vector<40x256xf32>
    %101 = vector.broadcast %29 : vector<40x1xf32> to vector<40x256xf32>
    %102 = arith.addf %65, %101 : vector<40x256xf32>
    %103 = arith.subf %84, %76 : vector<40x256xf32>
    %104 = arith.subf %102, %103 : vector<40x256xf32>
    %105 = vector.broadcast %30 : vector<40x1xf32> to vector<40x256xf32>
    %106 = arith.addf %68, %105 : vector<40x256xf32>
    %107 = arith.subf %100, %92 : vector<40x256xf32>
    %108 = arith.subf %106, %107 : vector<40x256xf32>
    %cst_28 = arith.constant 0.000000e+00 : f32
    %109 = vector.broadcast %cst_28 : f32 to vector<40x256xf32>
    %110 = arith.cmpf ole, %104, %109 : vector<40x256xf32>
    %cst_29 = arith.constant 0.000000e+00 : f32
    %111 = vector.broadcast %cst_29 : f32 to vector<40x256xf32>
    %112 = arith.cmpf ole, %108, %111 : vector<40x256xf32>
    %113 = arith.ori %110, %112 : vector<40x256xi1>
    %114 = arith.mulf %104, %108 : vector<40x256xf32>
    %cst_30 = arith.constant 0.000000e+00 : f32
    %115 = vector.broadcast %cst_30 : f32 to vector<40x256xf32>
    %116 = arith.select %113, %115, %114 : vector<40x256xi1>, vector<40x256xf32>
    %117 = arith.mulf %65, %68 : vector<40x256xf32>
    %118 = arith.mulf %29, %30 : vector<40x1xf32>
    %119 = vector.broadcast %118 : vector<40x1xf32> to vector<40x256xf32>
    %120 = arith.addf %117, %119 : vector<40x256xf32>
    %121 = arith.subf %120, %116 : vector<40x256xf32>
    %cst_31 = arith.constant 5.000000e-01 : f32
    %122 = vector.shape_cast %32 : vector<40x1xf32> to vector<40x1xf32>
    %123 = vector.broadcast %122 : vector<40x1xf32> to vector<40x256xf32>
    %124 = vector.broadcast %cst_31 : f32 to vector<40x256xf32>
    %125 = arith.select %60, %123, %124 : vector<40x256xi1>, vector<40x256xf32>
    %126 = arith.subf %11, %125 : vector<40x256xf32>
    %127 = arith.mulf %126, %126 : vector<40x256xf32>
    %128 = vector.shape_cast %127 : vector<40x256xf32> to vector<1x40x256xf32>
    %cst_32 = arith.constant dense<0.000000e+00> : vector<1xf32>
    %129 = vector.multi_reduction <add>, %128, %cst_32 [1, 2] : vector<1x40x256xf32> to vector<1xf32>
    %130 = vector.shape_cast %129 : vector<1xf32> to vector<1x1x1xf32>
    %131 = vector.extract %130[0, 0, 0] : f32 from vector<1x1x1xf32>
    %cst_33 = arith.constant 5.000000e-01 : f32
    %132 = vector.shape_cast %33 : vector<40x1xf32> to vector<40x1xf32>
    %133 = vector.broadcast %132 : vector<40x1xf32> to vector<40x256xf32>
    %134 = vector.broadcast %cst_33 : f32 to vector<40x256xf32>
    %135 = arith.select %60, %133, %134 : vector<40x256xi1>, vector<40x256xf32>
    %136 = arith.subf %18, %135 : vector<40x256xf32>
    %137 = arith.mulf %136, %136 : vector<40x256xf32>
    %138 = vector.shape_cast %137 : vector<40x256xf32> to vector<1x40x256xf32>
    %cst_34 = arith.constant dense<0.000000e+00> : vector<1xf32>
    %139 = vector.multi_reduction <add>, %138, %cst_34 [1, 2] : vector<1x40x256xf32> to vector<1xf32>
    %140 = vector.shape_cast %139 : vector<1xf32> to vector<1x1x1xf32>
    %141 = vector.extract %140[0, 0, 0] : f32 from vector<1x1x1xf32>
    %cst_35 = arith.constant 0.000000e+00 : f32
    %142 = vector.shape_cast %34 : vector<40x1xf32> to vector<40x1xf32>
    %143 = vector.broadcast %142 : vector<40x1xf32> to vector<40x256xf32>
    %144 = vector.broadcast %cst_35 : f32 to vector<40x256xf32>
    %145 = arith.select %60, %143, %144 : vector<40x256xi1>, vector<40x256xf32>
    %146 = arith.subf %2, %145 : vector<40x256xf32>
    %147 = arith.mulf %146, %146 : vector<40x256xf32>
    %148 = vector.shape_cast %147 : vector<40x256xf32> to vector<1x40x256xf32>
    %cst_36 = arith.constant dense<0.000000e+00> : vector<1xf32>
    %149 = vector.multi_reduction <add>, %148, %cst_36 [1, 2] : vector<1x40x256xf32> to vector<1xf32>
    %150 = vector.shape_cast %149 : vector<1xf32> to vector<1x1x1xf32>
    %151 = vector.extract %150[0, 0, 0] : f32 from vector<1x1x1xf32>
    %cst_37 = arith.constant 0.000000e+00 : f32
    %152 = vector.shape_cast %35 : vector<40x1xf32> to vector<40x1xf32>
    %153 = vector.broadcast %152 : vector<40x1xf32> to vector<40x256xf32>
    %154 = vector.broadcast %cst_37 : f32 to vector<40x256xf32>
    %155 = arith.select %60, %153, %154 : vector<40x256xi1>, vector<40x256xf32>
    %156 = arith.subf %3, %155 : vector<40x256xf32>
    %157 = arith.mulf %156, %156 : vector<40x256xf32>
    %158 = vector.shape_cast %157 : vector<40x256xf32> to vector<1x40x256xf32>
    %cst_38 = arith.constant dense<0.000000e+00> : vector<1xf32>
    %159 = vector.multi_reduction <add>, %158, %cst_38 [1, 2] : vector<1x40x256xf32> to vector<1xf32>
    %160 = vector.shape_cast %159 : vector<1xf32> to vector<1x1x1xf32>
    %161 = vector.extract %160[0, 0, 0] : f32 from vector<1x1x1xf32>
    %162 = vector.broadcast %44 : vector<40x1xi1> to vector<40x256xi1>
    %163 = arith.andi %56, %162 : vector<40x256xi1>
    %cst_39 = arith.constant 6.000000e-01 : f32
    %164 = vector.broadcast %cst_39 : f32 to vector<40x256xf32>
    %165 = arith.mulf %164, %121 : vector<40x256xf32>
    %166 = arith.cmpf ogt, %116, %165 : vector<40x256xf32>
    %cst_40 = arith.constant dense<true> : vector<40x256xi1>
    %167 = arith.xori %166, %cst_40 : vector<40x256xi1>
    %168 = arith.andi %163, %167 : vector<40x256xi1>
    %cst_41 = arith.constant dense<true> : vector<40x256xi1>
    %169 = arith.xori %60, %cst_41 : vector<40x256xi1>
    %170 = arith.andi %168, %169 : vector<40x256xi1>
    %171 = arith.mulf %25, %25 : vector<40x256xf32>
    %cst_42 = arith.constant 0.000000e+00 : f32
    %172 = vector.broadcast %cst_42 : f32 to vector<40x256xf32>
    %173 = arith.select %170, %171, %172 : vector<40x256xi1>, vector<40x256xf32>
    %174 = vector.shape_cast %173 : vector<40x256xf32> to vector<1x40x256xf32>
    %cst_43 = arith.constant dense<0.000000e+00> : vector<1xf32>
    %175 = vector.multi_reduction <add>, %174, %cst_43 [1, 2] : vector<1x40x256xf32> to vector<1xf32>
    %176 = vector.shape_cast %175 : vector<1xf32> to vector<1x1x1xf32>
    %177 = vector.extract %176[0, 0, 0] : f32 from vector<1x1x1xf32>
    %178 = arith.mulf %25, %121 : vector<40x256xf32>
    %179 = arith.subf %178, %116 : vector<40x256xf32>
    %cst_44 = arith.constant 0.000000e+00 : f32
    %180 = vector.broadcast %cst_44 : f32 to vector<40x256xf32>
    %181 = arith.select %60, %179, %180 : vector<40x256xi1>, vector<40x256xf32>
    %cst_45 = arith.constant dense<0.000000e+00> : vector<40xf32>
    %182 = vector.multi_reduction <add>, %181, %cst_45 [1] : vector<40x256xf32> to vector<40xf32>
    %183 = vector.shape_cast %182 : vector<40xf32> to vector<40x1xf32>
    %cst_46 = arith.constant 0.000000e+00 : f32
    %184 = vector.broadcast %cst_46 : f32 to vector<40x256xf32>
    %185 = arith.select %60, %121, %184 : vector<40x256xi1>, vector<40x256xf32>
    %cst_47 = arith.constant dense<0.000000e+00> : vector<40xf32>
    %186 = vector.multi_reduction <add>, %185, %cst_47 [1] : vector<40x256xf32> to vector<40xf32>
    %187 = vector.shape_cast %186 : vector<40xf32> to vector<40x1xf32>
    %cst_48 = arith.constant 1.000000e+00 : f32
    %188 = vector.broadcast %cst_48 : f32 to vector<40x1xf32>
    %189 = arith.select %40, %187, %188 : vector<40x1xi1>, vector<40x1xf32>
    %190 = arith.divf %183, %189 : vector<40x1xf32>
    %191 = arith.mulf %190, %190 : vector<40x1xf32>
    %cst_49 = arith.constant 0.000000e+00 : f32
    %192 = vector.broadcast %cst_49 : f32 to vector<40x1xf32>
    %193 = arith.select %40, %191, %192 : vector<40x1xi1>, vector<40x1xf32>
    %194 = vector.shape_cast %193 : vector<40x1xf32> to vector<1x40x1xf32>
    %cst_50 = arith.constant dense<0.000000e+00> : vector<1xf32>
    %195 = vector.multi_reduction <add>, %194, %cst_50 [1, 2] : vector<1x40x1xf32> to vector<1xf32>
    %196 = vector.shape_cast %195 : vector<1xf32> to vector<1x1x1xf32>
    %197 = vector.extract %196[0, 0, 0] : f32 from vector<1x1x1xf32>
    %cst_51 = arith.constant 1.000000e+00 : f32
    %198 = arith.mulf %cst_51, %177 : f32
    %cst_52 = arith.constant 5.000000e+00 : f32
    %199 = arith.mulf %cst_52, %197 : f32
    %200 = arith.addf %198, %199 : f32
    %201 = vector.shape_cast %41 : vector<40x1xf32> to vector<1x40x1xf32>
    %cst_53 = arith.constant dense<0.000000e+00> : vector<1xf32>
    %202 = vector.multi_reduction <add>, %201, %cst_53 [1, 2] : vector<1x40x1xf32> to vector<1xf32>
    %203 = vector.shape_cast %202 : vector<1xf32> to vector<1x1x1xf32>
    %204 = vector.extract %203[0, 0, 0] : f32 from vector<1x1x1xf32>
    %205 = tpu.iota {dimensions = array<i32: 2>} : vector<1x1x128xi32>
    %c0_i32 = arith.constant 0 : i32
    %206 = vector.broadcast %c0_i32 : i32 to vector<1x1x128xi32>
    %207 = arith.cmpi eq, %205, %206 : vector<1x1x128xi32>
    %cst_54 = arith.constant 0.000000e+00 : f32
    %208 = vector.broadcast %131 : f32 to vector<1x1x128xf32>
    %209 = vector.broadcast %cst_54 : f32 to vector<1x1x128xf32>
    %210 = arith.select %207, %208, %209 : vector<1x1x128xi1>, vector<1x1x128xf32>
    %c1_i32 = arith.constant 1 : i32
    %211 = vector.broadcast %c1_i32 : i32 to vector<1x1x128xi32>
    %212 = arith.cmpi eq, %205, %211 : vector<1x1x128xi32>
    %cst_55 = arith.constant 0.000000e+00 : f32
    %213 = vector.broadcast %141 : f32 to vector<1x1x128xf32>
    %214 = vector.broadcast %cst_55 : f32 to vector<1x1x128xf32>
    %215 = arith.select %212, %213, %214 : vector<1x1x128xi1>, vector<1x1x128xf32>
    %216 = arith.addf %210, %215 : vector<1x1x128xf32>
    %c2_i32 = arith.constant 2 : i32
    %217 = vector.broadcast %c2_i32 : i32 to vector<1x1x128xi32>
    %218 = arith.cmpi eq, %205, %217 : vector<1x1x128xi32>
    %cst_56 = arith.constant 0.000000e+00 : f32
    %219 = vector.broadcast %151 : f32 to vector<1x1x128xf32>
    %220 = vector.broadcast %cst_56 : f32 to vector<1x1x128xf32>
    %221 = arith.select %218, %219, %220 : vector<1x1x128xi1>, vector<1x1x128xf32>
    %222 = arith.addf %216, %221 : vector<1x1x128xf32>
    %c3_i32 = arith.constant 3 : i32
    %223 = vector.broadcast %c3_i32 : i32 to vector<1x1x128xi32>
    %224 = arith.cmpi eq, %205, %223 : vector<1x1x128xi32>
    %cst_57 = arith.constant 0.000000e+00 : f32
    %225 = vector.broadcast %161 : f32 to vector<1x1x128xf32>
    %226 = vector.broadcast %cst_57 : f32 to vector<1x1x128xf32>
    %227 = arith.select %224, %225, %226 : vector<1x1x128xi1>, vector<1x1x128xf32>
    %228 = arith.addf %222, %227 : vector<1x1x128xf32>
    %c4_i32 = arith.constant 4 : i32
    %229 = vector.broadcast %c4_i32 : i32 to vector<1x1x128xi32>
    %230 = arith.cmpi eq, %205, %229 : vector<1x1x128xi32>
    %cst_58 = arith.constant 0.000000e+00 : f32
    %231 = vector.broadcast %200 : f32 to vector<1x1x128xf32>
    %232 = vector.broadcast %cst_58 : f32 to vector<1x1x128xf32>
    %233 = arith.select %230, %231, %232 : vector<1x1x128xi1>, vector<1x1x128xf32>
    %234 = arith.addf %228, %233 : vector<1x1x128xf32>
    %c5_i32 = arith.constant 5 : i32
    %235 = vector.broadcast %c5_i32 : i32 to vector<1x1x128xi32>
    %236 = arith.cmpi eq, %205, %235 : vector<1x1x128xi32>
    %cst_59 = arith.constant 0.000000e+00 : f32
    %237 = vector.broadcast %204 : f32 to vector<1x1x128xf32>
    %238 = vector.broadcast %cst_59 : f32 to vector<1x1x128xf32>
    %239 = arith.select %236, %237, %238 : vector<1x1x128xi1>, vector<1x1x128xf32>
    %240 = arith.addf %234, %239 : vector<1x1x128xf32>
    %c0_i32_60 = arith.constant 0 : i32
    %241 = arith.cmpi eq, %arg1, %c0_i32_60 : i32
    %242 = arith.extui %241 : i1 to i32
    %c0_i32_61 = arith.constant 0 : i32
    %243 = arith.cmpi ne, %242, %c0_i32_61 : i32
    scf.if %243 {
      %c0_64 = arith.constant 0 : index
      %c0_65 = arith.constant 0 : index
      %c0_66 = arith.constant 0 : index
      %247 = vector.load %arg4[%c0_64, %c0_65, %c0_66] : memref<1x1x128xf32, #tpu.memory_space<vmem>>, vector<1x1x128xf32>
      tpu.vector_store %arg4[%c0_64, %c0_65, %c0_66], %240 {strides = array<i32>} : memref<1x1x128xf32, #tpu.memory_space<vmem>>, vector<1x1x128xf32>,
    } else {
    }
    %c0_i32_62 = arith.constant 0 : i32
    %244 = arith.cmpi ne, %arg1, %c0_i32_62 : i32
    %245 = arith.extui %244 : i1 to i32
    %c0_i32_63 = arith.constant 0 : i32
    %246 = arith.cmpi ne, %245, %c0_i32_63 : i32
    scf.if %246 {
      %c0_64 = arith.constant 0 : index
      %c0_65 = arith.constant 0 : index
      %c0_66 = arith.constant 0 : index
      %247 = vector.load %arg4[%c0_64, %c0_65, %c0_66] : memref<1x1x128xf32, #tpu.memory_space<vmem>>, vector<1x1x128xf32>
      %248 = arith.addf %247, %240 : vector<1x1x128xf32>
      %c0_67 = arith.constant 0 : index
      %c0_68 = arith.constant 0 : index
      %c0_69 = arith.constant 0 : index
      %249 = vector.load %arg4[%c0_67, %c0_68, %c0_69] : memref<1x1x128xf32, #tpu.memory_space<vmem>>, vector<1x1x128xf32>
      tpu.vector_store %arg4[%c0_67, %c0_68, %c0_69], %248 {strides = array<i32>} : memref<1x1x128xf32, #tpu.memory_space<vmem>>, vector<1x1x128xf32>,
    } else {
    }
    return
  }
  func.func @transform_0(%arg0: i32, %arg1: i32) -> (i32, i32) {
    %c1_i32 = arith.constant 1 : i32
    %0 = arith.muli %arg0, %c1_i32 : i32
    %1 = arith.addi %0, %arg1 : i32
    %c0_i32 = arith.constant 0 : i32
    %c0_i32_0 = arith.constant 0 : i32
    return %1, %c0_i32 : i32, i32
  }
  func.func @transform_1(%arg0: i32, %arg1: i32) -> (i32, i32) {
    %c1_i32 = arith.constant 1 : i32
    %0 = arith.muli %arg0, %c1_i32 : i32
    %1 = arith.addi %0, %arg1 : i32
    %c0_i32 = arith.constant 0 : i32
    %c0_i32_0 = arith.constant 0 : i32
    return %1, %c0_i32 : i32, i32
  }
  func.func @transform_2(%arg0: i32, %arg1: i32) -> (i32, i32, i32) {
    %c0_i32 = arith.constant 0 : i32
    %c0_i32_0 = arith.constant 0 : i32
    %c0_i32_1 = arith.constant 0 : i32
    return %arg0, %c0_i32, %c0_i32_0 : i32, i32, i32
  }
}

</mosaic_0001>

<llo_original>
// kernel: tpu_custom_call.1
$region0: #{tpu_custom_call.1}
  #allocation0 [shape = 'u32[]', space=smem, size = 0x4, offset = 0x4, fixed_abs, tag = 'smem constant byte address 0x4 - core index']
  #allocation1 [shape = 'u32[72,128]{1,0:T(1,128)}', space=vmem, size = 0x9000, scoped, tag = 'internal scratch']
  %s0 = inlined_call_operand.hbm [shape: f32[40,1280], index: 0, kind: input, shape index: {}]
  %s1 = inlined_call_operand.vmem [shape: f32[40,16], index: 1, kind: input, shape index: {}]
  %s2 = inlined_call_operand.hbm [shape: f32[1,1,128], index: 2, kind: output, shape index: {}]
  %s3 = sld [smem:[#allocation0]]
  $region30: #{tpu_custom_call.1} parent=0
    _
  %s5 = ssub.s32 1, %s3
  %s6 = scalar_select 0, %s5, %s3
  $region1: #{tpu_custom_call.1} parent=0
    #allocation2 [shape = 'u8[204800]{0}', space=vmem, size = 0x32000, scoped, tag = 'input window, operand 0, single buffered']
    #allocation3 [shape = 's32[1]{0}', space=sflag, size = 0x4, scoped, tag = 'scoped memory for tpu_custom_call.1']
    #allocation4 [shape = 's32[1]{0}', space=sflag, size = 0x4, scoped, tag = 'scoped memory for tpu_custom_call.1']
    #allocation5 [shape = 'u8[512]{0}', space=vmem, size = 0x400, scoped, tag = 'output window, operand 0, single buffered']
    %7 = vsyncpa [#allocation3], 0
    %8 = vsyncpa [#allocation4], 0
    // Predicated region
    $region2: #{tpu_custom_call.1} parent=1 // pred_check
      _
    $region3: #{tpu_custom_call.1} parent=1 // pred_check_branch
      %10 = sbr.rel (0) target = $region5
    $region4: #{tpu_custom_call.1} parent=1 // pred_region
      %s11 = sadd.s32 0, 0
      %s12 = smul.u32 5, %s11
      %14 = vsyncadd [#allocation3], 0
      %s15 = smul.addr %s12, 10
      %s16 = smul.addr %s15, 8
      %s17 = scalar_lea.hbm %s0, %s16
      %s18 = sshll.u32 %s17, 4
      %s19 = int_to_ptr.hbm [resolvable:$true] %s18
      %s20 = sshll.u32 [#allocation2], 4
      %s21 = int_to_ptr.vmem [resolvable:$true] %s20
      %26 = dma.hbm_to_vmem [thread:$0]  %s19, 6400, %s21, [#allocation3], 1280, 1280, 80
    $region5: #{tpu_custom_call.1} parent=1 // pred_fallthru
      _
    // Predicated region
    $region6: #{tpu_custom_call.1} parent=1 // pred_check
      _
    $region7: #{tpu_custom_call.1} parent=1 // pred_check_branch
      %28 = sbr.rel (0) target = $region9
    $region8: #{tpu_custom_call.1} parent=1 // pred_region
      %s29 = sadd.s32 0, 0
      %s30 = smul.u32 5, %s29
      %p31 = scmp.lt.s32.totalorder %s30, 4
      %s32 = scalar_select %p31, %s30, 4
      %s33 = smul.addr %s32, 8
      %s34 = scalar_lea.vmem %s1, %s33
      %s35 = sadd.s32 0, 0
      %s36 = smul.u32 5, %s35
    $region9: #{tpu_custom_call.1} parent=1 // pred_fallthru
      _
    // Predicated region
    $region10: #{tpu_custom_call.1} parent=1 // pred_check
      _
    $region11: #{tpu_custom_call.1} parent=1 // pred_check_branch
      %38 = sbr.rel (0) target = $region13
    $region12: #{tpu_custom_call.1} parent=1 // pred_region
      %40 = dma.done [#allocation3], 6400
    $region13: #{tpu_custom_call.1} parent=1 // pred_fallthru
      _
    %s41 = sadd.s32 0, 0
    %s42 = smul.u32 5, %s41
    %p43 = scmp.lt.s32.totalorder %s42, 4
    %s44 = scalar_select %p43, %s42, 4
    %s45 = smul.addr %s44, 8
    %s46 = scalar_lea.vmem %s1, %s45
    %s47 = sadd.s32 0, 0
    %s48 = smul.u32 5, %s47
    %s49 = sadd.s32 0, 0
    %s50 = smul.u32 5, %s49
    %p51 = scmp.lt.s32.totalorder %s50, 4
    %s52 = scalar_select %p51, %s50, 4
    %s53 = smul.addr %s52, 8
    %s54 = scalar_lea.vmem %s1, %s53
    %s55 = sadd.s32 0, 0
    %s56 = smul.u32 5, %s55
    %v57 = vld [vmem:[#allocation2] sm:$0xff]
    %v58 = vld [vmem:[#allocation2 + $0x8] sm:$0xff]
    %v59 = vld [vmem:[#allocation2 + $0x50] sm:$0xff]
    %v60 = vld [vmem:[#allocation2 + $0x58] sm:$0xff]
    %v61 = vld [vmem:[#allocation2 + $0xa0] sm:$0xff]
    %v62 = vld [vmem:[#allocation2 + $0xa8] sm:$0xff]
    %v63 = vld [vmem:[#allocation2 + $0xf0] sm:$0xff]
    %v64 = vld [vmem:[#allocation2 + $0xf8] sm:$0xff]
    %v65 = vld [vmem:[#allocation2 + $0x140] sm:$0xff]
    %v66 = vld [vmem:[#allocation2 + $0x148] sm:$0xff]
    %v67 = vld [vmem:[#allocation2 + $0x10] sm:$0xff]
    %v68 = vld [vmem:[#allocation2 + $0x18] sm:$0xff]
    %v69 = vld [vmem:[#allocation2 + $0x60] sm:$0xff]
    %v70 = vld [vmem:[#allocation2 + $0x68] sm:$0xff]
    %v71 = vld [vmem:[#allocation2 + $0xb0] sm:$0xff]
    %v72 = vld [vmem:[#allocation2 + $0xb8] sm:$0xff]
    %v73 = vld [vmem:[#allocation2 + $0x100] sm:$0xff]
    %v74 = vld [vmem:[#allocation2 + $0x108] sm:$0xff]
    %v75 = vld [vmem:[#allocation2 + $0x150] sm:$0xff]
    %v76 = vld [vmem:[#allocation2 + $0x158] sm:$0xff]
    %v77 = vld [vmem:[#allocation2 + $0x20] sm:$0xff]
    %v78 = vld [vmem:[#allocation2 + $0x28] sm:$0xff]
    %v79 = vld [vmem:[#allocation2 + $0x70] sm:$0xff]
    %v80 = vld [vmem:[#allocation2 + $0x78] sm:$0xff]
    %v81 = vld [vmem:[#allocation2 + $0xc0] sm:$0xff]
    %v82 = vld [vmem:[#allocation2 + $0xc8] sm:$0xff]
    %v83 = vld [vmem:[#allocation2 + $0x110] sm:$0xff]
    %v84 = vld [vmem:[#allocation2 + $0x118] sm:$0xff]
    %v85 = vld [vmem:[#allocation2 + $0x160] sm:$0xff]
    %v86 = vld [vmem:[#allocation2 + $0x168] sm:$0xff]
    %v87 = vld [vmem:[#allocation2 + $0x30] sm:$0xff]
    %v88 = vld [vmem:[#allocation2 + $0x38] sm:$0xff]
    %v89 = vld [vmem:[#allocation2 + $0x80] sm:$0xff]
    %v90 = vld [vmem:[#allocation2 + $0x88] sm:$0xff]
    %v91 = vld [vmem:[#allocation2 + $0xd0] sm:$0xff]
    %v92 = vld [vmem:[#allocation2 + $0xd8] sm:$0xff]
    %v93 = vld [vmem:[#allocation2 + $0x120] sm:$0xff]
    %v94 = vld [vmem:[#allocation2 + $0x128] sm:$0xff]
    %v95 = vld [vmem:[#allocation2 + $0x170] sm:$0xff]
    %v96 = vld [vmem:[#allocation2 + $0x178] sm:$0xff]
    %v97 = vld [vmem:[#allocation2 + $0x40] sm:$0xff]
    %v98 = vld [vmem:[#allocation2 + $0x48] sm:$0xff]
    %v99 = vld [vmem:[#allocation2 + $0x90] sm:$0xff]
    %v100 = vld [vmem:[#allocation2 + $0x98] sm:$0xff]
    %v101 = vld [vmem:[#allocation2 + $0xe0] sm:$0xff]
    %v102 = vld [vmem:[#allocation2 + $0xe8] sm:$0xff]
    %v103 = vld [vmem:[#allocation2 + $0x130] sm:$0xff]
    %v104 = vld [vmem:[#allocation2 + $0x138] sm:$0xff]
    %v105 = vld [vmem:[#allocation2 + $0x180] sm:$0xff]
    %v106 = vld [vmem:[#allocation2 + $0x188] sm:$0xff]
    %v107 = vmul.f32 %v57, 0.5
    %v108 = vmul.f32 %v58, 0.5
    %v109 = vmul.f32 %v59, 0.5
    %v110 = vmul.f32 %v60, 0.5
    %v111 = vmul.f32 %v61, 0.5
    %v112 = vmul.f32 %v62, 0.5
    %v113 = vmul.f32 %v63, 0.5
    %v114 = vmul.f32 %v64, 0.5
    %v115 = vmul.f32 %v65, 0.5
    %v116 = vmul.f32 %v66, 0.5
    %v117 = vtanh.pop %v107
    %v118 = vtanh.pop %v108
    %v119 = vtanh.pop %v109
    %v120 = vtanh.pop %v110
    %v121 = vtanh.pop %v111
    %v122 = vtanh.pop %v112
    %v123 = vtanh.pop %v113
    %v124 = vtanh.pop %v114
    %v125 = vtanh.pop %v115
    %v126 = vtanh.pop %v116
    %v127 = vmul.f32 %v117, 0.5
    %v128 = vmul.f32 %v118, 0.5
    %v129 = vmul.f32 %v119, 0.5
    %v130 = vmul.f32 %v120, 0.5
    %v131 = vmul.f32 %v121, 0.5
    %v132 = vmul.f32 %v122, 0.5
    %v133 = vmul.f32 %v123, 0.5
    %v134 = vmul.f32 %v124, 0.5
    %v135 = vmul.f32 %v125, 0.5
    %v136 = vmul.f32 %v126, 0.5
    %v137 = vadd.f32 %v127, 0.5
    %v138 = vadd.f32 %v128, 0.5
    %v139 = vadd.f32 %v129, 0.5
    %v140 = vadd.f32 %v130, 0.5
    %v141 = vadd.f32 %v131, 0.5
    %v142 = vadd.f32 %v132, 0.5
    %v143 = vadd.f32 %v133, 0.5
    %v144 = vadd.f32 %v134, 0.5
    %v145 = vadd.f32 %v135, 0.5
    %v146 = vadd.f32 %v136, 0.5
    %v147 = vmul.f32 %v67, 0.5
    %v148 = vmul.f32 %v68, 0.5
    %v149 = vmul.f32 %v69, 0.5
    %v150 = vmul.f32 %v70, 0.5
    %v151 = vmul.f32 %v71, 0.5
    %v152 = vmul.f32 %v72, 0.5
    %v153 = vmul.f32 %v73, 0.5
    %v154 = vmul.f32 %v74, 0.5
    %v155 = vmul.f32 %v75, 0.5
    %v156 = vmul.f32 %v76, 0.5
    %v157 = vtanh.pop %v147
    %v158 = vtanh.pop %v148
    %v159 = vtanh.pop %v149
    %v160 = vtanh.pop %v150
    %v161 = vtanh.pop %v151
    %v162 = vtanh.pop %v152
    %v163 = vtanh.pop %v153
    %v164 = vtanh.pop %v154
    %v165 = vtanh.pop %v155
    %v166 = vtanh.pop %v156
    %v167 = vmul.f32 %v157, 0.5
    %v168 = vmul.f32 %v158, 0.5
    %v169 = vmul.f32 %v159, 0.5
    %v170 = vmul.f32 %v160, 0.5
    %v171 = vmul.f32 %v161, 0.5
    %v172 = vmul.f32 %v162, 0.5
    %v173 = vmul.f32 %v163, 0.5
    %v174 = vmul.f32 %v164, 0.5
    %v175 = vmul.f32 %v165, 0.5
    %v176 = vmul.f32 %v166, 0.5
    %v177 = vadd.f32 %v167, 0.5
    %v178 = vadd.f32 %v168, 0.5
    %v179 = vadd.f32 %v169, 0.5
    %v180 = vadd.f32 %v170, 0.5
    %v181 = vadd.f32 %v171, 0.5
    %v182 = vadd.f32 %v172, 0.5
    %v183 = vadd.f32 %v173, 0.5
    %v184 = vadd.f32 %v174, 0.5
    %v185 = vadd.f32 %v175, 0.5
    %v186 = vadd.f32 %v176, 0.5
    %v187 = vmul.f32 %v97, 0.5
    %v188 = vmul.f32 %v98, 0.5
    %v189 = vmul.f32 %v99, 0.5
    %v190 = vmul.f32 %v100, 0.5
    %v191 = vmul.f32 %v101, 0.5
    %v192 = vmul.f32 %v102, 0.5
    %v193 = vmul.f32 %v103, 0.5
    %v194 = vmul.f32 %v104, 0.5
    %v195 = vmul.f32 %v105, 0.5
    %v196 = vmul.f32 %v106, 0.5
    %v197 = vtanh.pop %v187
    %v198 = vtanh.pop %v188
    %v199 = vtanh.pop %v189
    %v200 = vtanh.pop %v190
    %v201 = vtanh.pop %v191
    %v202 = vtanh.pop %v192
    %v203 = vtanh.pop %v193
    %v204 = vtanh.pop %v194
    %v205 = vtanh.pop %v195
    %v206 = vtanh.pop %v196
    %v207 = vmul.f32 %v197, 0.5
    %v208 = vmul.f32 %v198, 0.5
    %v209 = vmul.f32 %v199, 0.5
    %v210 = vmul.f32 %v200, 0.5
    %v211 = vmul.f32 %v201, 0.5
    %v212 = vmul.f32 %v202, 0.5
    %v213 = vmul.f32 %v203, 0.5
    %v214 = vmul.f32 %v204, 0.5
    %v215 = vmul.f32 %v205, 0.5
    %v216 = vmul.f32 %v206, 0.5
    %v217 = vadd.f32 %v207, 0.5
    %v218 = vadd.f32 %v208, 0.5
    %v219 = vadd.f32 %v209, 0.5
    %v220 = vadd.f32 %v210, 0.5
    %v221 = vadd.f32 %v211, 0.5
    %v222 = vadd.f32 %v212, 0.5
    %v223 = vadd.f32 %v213, 0.5
    %v224 = vadd.f32 %v214, 0.5
    %v225 = vadd.f32 %v215, 0.5
    %v226 = vadd.f32 %v216, 0.5
    %v227 = vld [vmem:[%s54] sm:$0xff]
    %v228 = vld [vmem:[%s54 + $0x8] sm:$0xff]
    %v229 = vld [vmem:[%s54 + $0x10] sm:$0xff]
    %v230 = vld [vmem:[%s54 + $0x18] sm:$0xff]
    %v231 = vld [vmem:[%s54 + $0x20] sm:$0xff]
    %vm232 = vcmp.gt.f32.partialorder %v227, 0.0
    %vm233 = vcmp.gt.f32.partialorder %v228, 0.0
    %vm234 = vcmp.gt.f32.partialorder %v229, 0.0
    %vm235 = vcmp.gt.f32.partialorder %v230, 0.0
    %vm236 = vcmp.gt.f32.partialorder %v231, 0.0
    %v237 = vlaneseq
    %v238 = vand.u32 %v237, 127
    %v239 = vadd.s32 %v238, 128
    %v240 = vcvt.s32.f32 %v238
    %v241 = vcvt.s32.f32 %v239
    %v242 = vadd.f32 %v240, 0.5
    %v243 = vadd.f32 %v241, 0.5
    %v244 = vmul.f32 %v242, 0.0625
    %v245 = vmul.f32 %v243, 0.0625
    %v246 = vfloor.f32 %v244
    %v247 = vfloor.f32 %v245
    %v248 = vmul.f32 %v246, 16.0
    %v249 = vmul.f32 %v247, 16.0
    %v250 = vsub.f32 %v240, %v248
    %v251 = vsub.f32 %v241, %v249
    %vm252 = vcmp.lt.s32.totalorder %v238, 256
    %vm253 = vcmp.lt.s32.totalorder %v239, 256
    %255 = vset.pattern.permute.xlu0 4
    %256 = vperm.xlu0 %255, %v227
    %v257 = vpop.permute.xlu0 %256
    %260 = vset.pattern.permute.xlu0 4
    %261 = vperm.xlu0 %260, %v228
    %v262 = vpop.permute.xlu0 %261
    %265 = vset.pattern.permute.xlu0 4
    %266 = vperm.xlu0 %265, %v229
    %v267 = vpop.permute.xlu0 %266
    %270 = vset.pattern.permute.xlu0 4
    %271 = vperm.xlu0 %270, %v230
    %v272 = vpop.permute.xlu0 %271
    %275 = vset.pattern.permute.xlu0 4
    %276 = vperm.xlu0 %275, %v231
    %v277 = vpop.permute.xlu0 %276
    %vm279 = vcmp.eq.f32.partialorder %v240, %v257
    %vm280 = vcmp.eq.f32.partialorder %v241, %v257
    %vm281 = vcmp.eq.f32.partialorder %v240, %v262
    %vm282 = vcmp.eq.f32.partialorder %v241, %v262
    %vm283 = vcmp.eq.f32.partialorder %v240, %v267
    %vm284 = vcmp.eq.f32.partialorder %v241, %v267
    %vm285 = vcmp.eq.f32.partialorder %v240, %v272
    %vm286 = vcmp.eq.f32.partialorder %v241, %v272
    %vm287 = vcmp.eq.f32.partialorder %v240, %v277
    %vm288 = vcmp.eq.f32.partialorder %v241, %v277
    %v289 = vsel %vm232, 1, 0
    %v290 = vsel %vm233, 1, 0
    %v291 = vsel %vm234, 1, 0
    %v292 = vsel %vm235, 1, 0
    %v293 = vsel %vm236, 1, 0
    %294 = vset.pattern.permute.xlu0 11
    %295 = vperm.xlu0 %294, %v289
    %v296 = vpop.permute.xlu0 %295
    %297 = vset.pattern.permute.xlu0 11
    %298 = vperm.xlu0 %297, %v290
    %v299 = vpop.permute.xlu0 %298
    %300 = vset.pattern.permute.xlu0 11
    %301 = vperm.xlu0 %300, %v291
    %v302 = vpop.permute.xlu0 %301
    %303 = vset.pattern.permute.xlu0 11
    %304 = vperm.xlu0 %303, %v292
    %v305 = vpop.permute.xlu0 %304
    %306 = vset.pattern.permute.xlu0 11
    %307 = vperm.xlu0 %306, %v293
    %v308 = vpop.permute.xlu0 %307
    %vm309 = vcmp.eq.s32.totalorder %v296, 1
    %vm310 = vcmp.eq.s32.totalorder %v299, 1
    %vm311 = vcmp.eq.s32.totalorder %v302, 1
    %vm312 = vcmp.eq.s32.totalorder %v305, 1
    %vm313 = vcmp.eq.s32.totalorder %v308, 1
    %vm314 = vmand %vm279, %vm309
    %vm315 = vmand %vm280, %vm309
    %vm316 = vmand %vm281, %vm310
    %vm317 = vmand %vm282, %vm310
    %vm318 = vmand %vm283, %vm311
    %vm319 = vmand %vm284, %vm311
    %vm320 = vmand %vm285, %vm312
    %vm321 = vmand %vm286, %vm312
    %vm322 = vmand %vm287, %vm313
    %vm323 = vmand %vm288, %vm313
    %v324 = vadd.f32 %v137, %v250
    %v325 = vadd.f32 %v138, %v251
    %v326 = vadd.f32 %v139, %v250
    %v327 = vadd.f32 %v140, %v251
    %v328 = vadd.f32 %v141, %v250
    %v329 = vadd.f32 %v142, %v251
    %v330 = vadd.f32 %v143, %v250
    %v331 = vadd.f32 %v144, %v251
    %v332 = vadd.f32 %v145, %v250
    %v333 = vadd.f32 %v146, %v251
    %v334 = vadd.f32 %v177, %v246
    %v335 = vadd.f32 %v178, %v247
    %v336 = vadd.f32 %v179, %v246
    %v337 = vadd.f32 %v180, %v247
    %v338 = vadd.f32 %v181, %v246
    %v339 = vadd.f32 %v182, %v247
    %v340 = vadd.f32 %v183, %v246
    %v341 = vadd.f32 %v184, %v247
    %v342 = vadd.f32 %v185, %v246
    %v343 = vadd.f32 %v186, %v247
    %v344 = vmul.f32 %v77, 1.442695
    %v345 = vpow.pop %v344
    %v346 = vmul.f32 %v78, 1.442695
    %v347 = vpow.pop %v346
    %v348 = vmul.f32 %v79, 1.442695
    %v349 = vpow.pop %v348
    %v350 = vmul.f32 %v80, 1.442695
    %v351 = vpow.pop %v350
    %v352 = vmul.f32 %v81, 1.442695
    %v353 = vpow.pop %v352
    %v354 = vmul.f32 %v82, 1.442695
    %v355 = vpow.pop %v354
    %v356 = vmul.f32 %v83, 1.442695
    %v357 = vpow.pop %v356
    %v358 = vmul.f32 %v84, 1.442695
    %v359 = vpow.pop %v358
    %v360 = vmul.f32 %v85, 1.442695
    %v361 = vpow.pop %v360
    %v362 = vmul.f32 %v86, 1.442695
    %v363 = vpow.pop %v362
    %364 = vset.pattern.permute.xlu0 9
    %365 = vperm.xlu0 %364, %v227
    %v366 = vpop.permute.xlu0 %365
    %368 = vset.pattern.permute.xlu0 9
    %369 = vperm.xlu0 %368, %v228
    %v370 = vpop.permute.xlu0 %369
    %372 = vset.pattern.permute.xlu0 9
    %373 = vperm.xlu0 %372, %v229
    %v374 = vpop.permute.xlu0 %373
    %376 = vset.pattern.permute.xlu0 9
    %377 = vperm.xlu0 %376, %v230
    %v378 = vpop.permute.xlu0 %377
    %380 = vset.pattern.permute.xlu0 9
    %381 = vperm.xlu0 %380, %v231
    %v382 = vpop.permute.xlu0 %381
    %v384 = vmul.f32 %v345, %v366
    %v385 = vmul.f32 %v347, %v366
    %v386 = vmul.f32 %v349, %v370
    %v387 = vmul.f32 %v351, %v370
    %v388 = vmul.f32 %v353, %v374
    %v389 = vmul.f32 %v355, %v374
    %v390 = vmul.f32 %v357, %v378
    %v391 = vmul.f32 %v359, %v378
    %v392 = vmul.f32 %v361, %v382
    %v393 = vmul.f32 %v363, %v382
    %v394 = vmul.f32 %v87, 1.442695
    %v395 = vpow.pop %v394
    %v396 = vmul.f32 %v88, 1.442695
    %v397 = vpow.pop %v396
    %v398 = vmul.f32 %v89, 1.442695
    %v399 = vpow.pop %v398
    %v400 = vmul.f32 %v90, 1.442695
    %v401 = vpow.pop %v400
    %v402 = vmul.f32 %v91, 1.442695
    %v403 = vpow.pop %v402
    %v404 = vmul.f32 %v92, 1.442695
    %v405 = vpow.pop %v404
    %v406 = vmul.f32 %v93, 1.442695
    %v407 = vpow.pop %v406
    %v408 = vmul.f32 %v94, 1.442695
    %v409 = vpow.pop %v408
    %v410 = vmul.f32 %v95, 1.442695
    %v411 = vpow.pop %v410
    %v412 = vmul.f32 %v96, 1.442695
    %v413 = vpow.pop %v412
    %414 = vset.pattern.permute.xlu0 10
    %415 = vperm.xlu0 %414, %v227
    %v416 = vpop.permute.xlu0 %415
    %418 = vset.pattern.permute.xlu0 10
    %419 = vperm.xlu0 %418, %v228
    %v420 = vpop.permute.xlu0 %419
    %422 = vset.pattern.permute.xlu0 10
    %423 = vperm.xlu0 %422, %v229
    %v424 = vpop.permute.xlu0 %423
    %426 = vset.pattern.permute.xlu0 10
    %427 = vperm.xlu0 %426, %v230
    %v428 = vpop.permute.xlu0 %427
    %430 = vset.pattern.permute.xlu0 10
    %431 = vperm.xlu0 %430, %v231
    %v432 = vpop.permute.xlu0 %431
    %v434 = vmul.f32 %v395, %v416
    %v435 = vmul.f32 %v397, %v416
    %v436 = vmul.f32 %v399, %v420
    %v437 = vmul.f32 %v401, %v420
    %v438 = vmul.f32 %v403, %v424
    %v439 = vmul.f32 %v405, %v424
    %v440 = vmul.f32 %v407, %v428
    %v441 = vmul.f32 %v409, %v428
    %v442 = vmul.f32 %v411, %v432
    %v443 = vmul.f32 %v413, %v432
    %v444 = vmul.f32 %v384, 0.5
    %v445 = vmul.f32 %v385, 0.5
    %v446 = vmul.f32 %v386, 0.5
    %v447 = vmul.f32 %v387, 0.5
    %v448 = vmul.f32 %v388, 0.5
    %v449 = vmul.f32 %v389, 0.5
    %v450 = vmul.f32 %v390, 0.5
    %v451 = vmul.f32 %v391, 0.5
    %v452 = vmul.f32 %v392, 0.5
    %v453 = vmul.f32 %v393, 0.5
    %v454 = vsub.f32 %v324, %v444
    %v455 = vsub.f32 %v325, %v445
    %v456 = vsub.f32 %v326, %v446
    %v457 = vsub.f32 %v327, %v447
    %v458 = vsub.f32 %v328, %v448
    %v459 = vsub.f32 %v329, %v449
    %v460 = vsub.f32 %v330, %v450
    %v461 = vsub.f32 %v331, %v451
    %v462 = vsub.f32 %v332, %v452
    %v463 = vsub.f32 %v333, %v453
    %v464 = vmul.f32 %v227, 0.5
    %v465 = vmul.f32 %v228, 0.5
    %v466 = vmul.f32 %v229, 0.5
    %v467 = vmul.f32 %v230, 0.5
    %v468 = vmul.f32 %v231, 0.5
    %474 = vrot.lane.b32.xlu0 %v464, 126
    %v475 = vpop.permute.xlu0 %474
    %476 = vrot.lane.b32.xlu0 %v465, 126
    %v477 = vpop.permute.xlu0 %476
    %478 = vrot.lane.b32.xlu0 %v466, 126
    %v479 = vpop.permute.xlu0 %478
    %480 = vrot.lane.b32.xlu0 %v467, 126
    %v481 = vpop.permute.xlu0 %480
    %482 = vrot.lane.b32.xlu0 %v468, 126
    %v483 = vpop.permute.xlu0 %482
    %v489 = vsub.f32 %v227, %v475
    %v490 = vsub.f32 %v228, %v477
    %v491 = vsub.f32 %v229, %v479
    %v492 = vsub.f32 %v230, %v481
    %v493 = vsub.f32 %v231, %v483
    %495 = vset.pattern.permute.xlu0 0
    %496 = vperm.xlu0 %495, %v489
    %v497 = vpop.permute.xlu0 %496
    %500 = vset.pattern.permute.xlu0 0
    %501 = vperm.xlu0 %500, %v490
    %v502 = vpop.permute.xlu0 %501
    %505 = vset.pattern.permute.xlu0 0
    %506 = vperm.xlu0 %505, %v491
    %v507 = vpop.permute.xlu0 %506
    %510 = vset.pattern.permute.xlu0 0
    %511 = vperm.xlu0 %510, %v492
    %v512 = vpop.permute.xlu0 %511
    %515 = vset.pattern.permute.xlu0 0
    %516 = vperm.xlu0 %515, %v493
    %v517 = vpop.permute.xlu0 %516
    %v519 = vmin.f32 %v454, %v497
    %v520 = vmin.f32 %v455, %v497
    %v521 = vmin.f32 %v456, %v502
    %v522 = vmin.f32 %v457, %v502
    %v523 = vmin.f32 %v458, %v507
    %v524 = vmin.f32 %v459, %v507
    %v525 = vmin.f32 %v460, %v512
    %v526 = vmin.f32 %v461, %v512
    %v527 = vmin.f32 %v462, %v517
    %v528 = vmin.f32 %v463, %v517
    %v529 = vadd.f32 %v324, %v444
    %v530 = vadd.f32 %v325, %v445
    %v531 = vadd.f32 %v326, %v446
    %v532 = vadd.f32 %v327, %v447
    %v533 = vadd.f32 %v328, %v448
    %v534 = vadd.f32 %v329, %v449
    %v535 = vadd.f32 %v330, %v450
    %v536 = vadd.f32 %v331, %v451
    %v537 = vadd.f32 %v332, %v452
    %v538 = vadd.f32 %v333, %v453
    %v539 = vadd.f32 %v227, %v475
    %v540 = vadd.f32 %v228, %v477
    %v541 = vadd.f32 %v229, %v479
    %v542 = vadd.f32 %v230, %v481
    %v543 = vadd.f32 %v231, %v483
    %545 = vset.pattern.permute.xlu0 0
    %546 = vperm.xlu0 %545, %v539
    %v547 = vpop.permute.xlu0 %546
    %550 = vset.pattern.permute.xlu0 0
    %551 = vperm.xlu0 %550, %v540
    %v552 = vpop.permute.xlu0 %551
    %555 = vset.pattern.permute.xlu0 0
    %556 = vperm.xlu0 %555, %v541
    %v557 = vpop.permute.xlu0 %556
    %560 = vset.pattern.permute.xlu0 0
    %561 = vperm.xlu0 %560, %v542
    %v562 = vpop.permute.xlu0 %561
    %565 = vset.pattern.permute.xlu0 0
    %566 = vperm.xlu0 %565, %v543
    %v567 = vpop.permute.xlu0 %566
    %v569 = vmax.f32 %v529, %v547
    %v570 = vmax.f32 %v530, %v547
    %v571 = vmax.f32 %v531, %v552
    %v572 = vmax.f32 %v532, %v552
    %v573 = vmax.f32 %v533, %v557
    %v574 = vmax.f32 %v534, %v557
    %v575 = vmax.f32 %v535, %v562
    %v576 = vmax.f32 %v536, %v562
    %v577 = vmax.f32 %v537, %v567
    %v578 = vmax.f32 %v538, %v567
    %v579 = vmul.f32 %v434, 0.5
    %v580 = vmul.f32 %v435, 0.5
    %v581 = vmul.f32 %v436, 0.5
    %v582 = vmul.f32 %v437, 0.5
    %v583 = vmul.f32 %v438, 0.5
    %v584 = vmul.f32 %v439, 0.5
    %v585 = vmul.f32 %v440, 0.5
    %v586 = vmul.f32 %v441, 0.5
    %v587 = vmul.f32 %v442, 0.5
    %v588 = vmul.f32 %v443, 0.5
    %v589 = vsub.f32 %v334, %v579
    %v590 = vsub.f32 %v335, %v580
    %v591 = vsub.f32 %v336, %v581
    %v592 = vsub.f32 %v337, %v582
    %v593 = vsub.f32 %v338, %v583
    %v594 = vsub.f32 %v339, %v584
    %v595 = vsub.f32 %v340, %v585
    %v596 = vsub.f32 %v341, %v586
    %v597 = vsub.f32 %v342, %v587
    %v598 = vsub.f32 %v343, %v588
    %599 = vset.pattern.permute.xlu0 1
    %600 = vperm.xlu0 %599, %v489
    %v601 = vpop.permute.xlu0 %600
    %603 = vset.pattern.permute.xlu0 1
    %604 = vperm.xlu0 %603, %v490
    %v605 = vpop.permute.xlu0 %604
    %607 = vset.pattern.permute.xlu0 1
    %608 = vperm.xlu0 %607, %v491
    %v609 = vpop.permute.xlu0 %608
    %611 = vset.pattern.permute.xlu0 1
    %612 = vperm.xlu0 %611, %v492
    %v613 = vpop.permute.xlu0 %612
    %615 = vset.pattern.permute.xlu0 1
    %616 = vperm.xlu0 %615, %v493
    %v617 = vpop.permute.xlu0 %616
    %v619 = vmin.f32 %v589, %v601
    %v620 = vmin.f32 %v590, %v601
    %v621 = vmin.f32 %v591, %v605
    %v622 = vmin.f32 %v592, %v605
    %v623 = vmin.f32 %v593, %v609
    %v624 = vmin.f32 %v594, %v609
    %v625 = vmin.f32 %v595, %v613
    %v626 = vmin.f32 %v596, %v613
    %v627 = vmin.f32 %v597, %v617
    %v628 = vmin.f32 %v598, %v617
    %v629 = vadd.f32 %v334, %v579
    %v630 = vadd.f32 %v335, %v580
    %v631 = vadd.f32 %v336, %v581
    %v632 = vadd.f32 %v337, %v582
    %v633 = vadd.f32 %v338, %v583
    %v634 = vadd.f32 %v339, %v584
    %v635 = vadd.f32 %v340, %v585
    %v636 = vadd.f32 %v341, %v586
    %v637 = vadd.f32 %v342, %v587
    %v638 = vadd.f32 %v343, %v588
    %639 = vset.pattern.permute.xlu0 1
    %640 = vperm.xlu0 %639, %v539
    %v641 = vpop.permute.xlu0 %640
    %643 = vset.pattern.permute.xlu0 1
    %644 = vperm.xlu0 %643, %v540
    %v645 = vpop.permute.xlu0 %644
    %647 = vset.pattern.permute.xlu0 1
    %648 = vperm.xlu0 %647, %v541
    %v649 = vpop.permute.xlu0 %648
    %651 = vset.pattern.permute.xlu0 1
    %652 = vperm.xlu0 %651, %v542
    %v653 = vpop.permute.xlu0 %652
    %655 = vset.pattern.permute.xlu0 1
    %656 = vperm.xlu0 %655, %v543
    %v657 = vpop.permute.xlu0 %656
    %v659 = vmax.f32 %v629, %v641
    %v660 = vmax.f32 %v630, %v641
    %v661 = vmax.f32 %v631, %v645
    %v662 = vmax.f32 %v632, %v645
    %v663 = vmax.f32 %v633, %v649
    %v664 = vmax.f32 %v634, %v649
    %v665 = vmax.f32 %v635, %v653
    %v666 = vmax.f32 %v636, %v653
    %v667 = vmax.f32 %v637, %v657
    %v668 = vmax.f32 %v638, %v657
    %669 = vset.pattern.permute.xlu0 2
    %670 = vperm.xlu0 %669, %v227
    %v671 = vpop.permute.xlu0 %670
    %673 = vset.pattern.permute.xlu0 2
    %674 = vperm.xlu0 %673, %v228
    %v675 = vpop.permute.xlu0 %674
    %677 = vset.pattern.permute.xlu0 2
    %678 = vperm.xlu0 %677, %v229
    %v679 = vpop.permute.xlu0 %678
    %681 = vset.pattern.permute.xlu0 2
    %682 = vperm.xlu0 %681, %v230
    %v683 = vpop.permute.xlu0 %682
    %685 = vset.pattern.permute.xlu0 2
    %686 = vperm.xlu0 %685, %v231
    %v687 = vpop.permute.xlu0 %686
    %v689 = vadd.f32 %v384, %v671
    %v690 = vadd.f32 %v385, %v671
    %v691 = vadd.f32 %v386, %v675
    %v692 = vadd.f32 %v387, %v675
    %v693 = vadd.f32 %v388, %v679
    %v694 = vadd.f32 %v389, %v679
    %v695 = vadd.f32 %v390, %v683
    %v696 = vadd.f32 %v391, %v683
    %v697 = vadd.f32 %v392, %v687
    %v698 = vadd.f32 %v393, %v687
    %v699 = vsub.f32 %v569, %v519
    %v700 = vsub.f32 %v570, %v520
    %v701 = vsub.f32 %v571, %v521
    %v702 = vsub.f32 %v572, %v522
    %v703 = vsub.f32 %v573, %v523
    %v704 = vsub.f32 %v574, %v524
    %v705 = vsub.f32 %v575, %v525
    %v706 = vsub.f32 %v576, %v526
    %v707 = vsub.f32 %v577, %v527
    %v708 = vsub.f32 %v578, %v528
    %v709 = vsub.f32 %v689, %v699
    %v710 = vsub.f32 %v690, %v700
    %v711 = vsub.f32 %v691, %v701
    %v712 = vsub.f32 %v692, %v702
    %v713 = vsub.f32 %v693, %v703
    %v714 = vsub.f32 %v694, %v704
    %v715 = vsub.f32 %v695, %v705
    %v716 = vsub.f32 %v696, %v706
    %v717 = vsub.f32 %v697, %v707
    %v718 = vsub.f32 %v698, %v708
    %719 = vset.pattern.permute.xlu0 3
    %720 = vperm.xlu0 %719, %v227
    %v721 = vpop.permute.xlu0 %720
    %723 = vset.pattern.permute.xlu0 3
    %724 = vperm.xlu0 %723, %v228
    %v725 = vpop.permute.xlu0 %724
    %727 = vset.pattern.permute.xlu0 3
    %728 = vperm.xlu0 %727, %v229
    %v729 = vpop.permute.xlu0 %728
    %731 = vset.pattern.permute.xlu0 3
    %732 = vperm.xlu0 %731, %v230
    %v733 = vpop.permute.xlu0 %732
    %735 = vset.pattern.permute.xlu0 3
    %736 = vperm.xlu0 %735, %v231
    %v737 = vpop.permute.xlu0 %736
    %v739 = vadd.f32 %v434, %v721
    %v740 = vadd.f32 %v435, %v721
    %v741 = vadd.f32 %v436, %v725
    %v742 = vadd.f32 %v437, %v725
    %v743 = vadd.f32 %v438, %v729
    %v744 = vadd.f32 %v439, %v729
    %v745 = vadd.f32 %v440, %v733
    %v746 = vadd.f32 %v441, %v733
    %v747 = vadd.f32 %v442, %v737
    %v748 = vadd.f32 %v443, %v737
    %v749 = vsub.f32 %v659, %v619
    %v750 = vsub.f32 %v660, %v620
    %v751 = vsub.f32 %v661, %v621
    %v752 = vsub.f32 %v662, %v622
    %v753 = vsub.f32 %v663, %v623
    %v754 = vsub.f32 %v664, %v624
    %v755 = vsub.f32 %v665, %v625
    %v756 = vsub.f32 %v666, %v626
    %v757 = vsub.f32 %v667, %v627
    %v758 = vsub.f32 %v668, %v628
    %v759 = vsub.f32 %v739, %v749
    %v760 = vsub.f32 %v740, %v750
    %v761 = vsub.f32 %v741, %v751
    %v762 = vsub.f32 %v742, %v752
    %v763 = vsub.f32 %v743, %v753
    %v764 = vsub.f32 %v744, %v754
    %v765 = vsub.f32 %v745, %v755
    %v766 = vsub.f32 %v746, %v756
    %v767 = vsub.f32 %v747, %v757
    %v768 = vsub.f32 %v748, %v758
    %vm769 = vcmp.le.f32.partialorder %v709, 0.0
    %vm770 = vcmp.le.f32.partialorder %v710, 0.0
    %vm771 = vcmp.le.f32.partialorder %v711, 0.0
    %vm772 = vcmp.le.f32.partialorder %v712, 0.0
    %vm773 = vcmp.le.f32.partialorder %v713, 0.0
    %vm774 = vcmp.le.f32.partialorder %v714, 0.0
    %vm775 = vcmp.le.f32.partialorder %v715, 0.0
    %vm776 = vcmp.le.f32.partialorder %v716, 0.0
    %vm777 = vcmp.le.f32.partialorder %v717, 0.0
    %vm778 = vcmp.le.f32.partialorder %v718, 0.0
    %vm779 = vcmp.le.f32.partialorder %v759, 0.0
    %vm780 = vcmp.le.f32.partialorder %v760, 0.0
    %vm781 = vcmp.le.f32.partialorder %v761, 0.0
    %vm782 = vcmp.le.f32.partialorder %v762, 0.0
    %vm783 = vcmp.le.f32.partialorder %v763, 0.0
    %vm784 = vcmp.le.f32.partialorder %v764, 0.0
    %vm785 = vcmp.le.f32.partialorder %v765, 0.0
    %vm786 = vcmp.le.f32.partialorder %v766, 0.0
    %vm787 = vcmp.le.f32.partialorder %v767, 0.0
    %vm788 = vcmp.le.f32.partialorder %v768, 0.0
    %vm789 = vmor %vm769, %vm779
    %vm790 = vmor %vm770, %vm780
    %vm791 = vmor %vm771, %vm781
    %vm792 = vmor %vm772, %vm782
    %vm793 = vmor %vm773, %vm783
    %vm794 = vmor %vm774, %vm784
    %vm795 = vmor %vm775, %vm785
    %vm796 = vmor %vm776, %vm786
    %vm797 = vmor %vm777, %vm787
    %vm798 = vmor %vm778, %vm788
    %v799 = vmul.f32 %v709, %v759
    %v800 = vmul.f32 %v710, %v760
    %v801 = vmul.f32 %v711, %v761
    %v802 = vmul.f32 %v712, %v762
    %v803 = vmul.f32 %v713, %v763
    %v804 = vmul.f32 %v714, %v764
    %v805 = vmul.f32 %v715, %v765
    %v806 = vmul.f32 %v716, %v766
    %v807 = vmul.f32 %v717, %v767
    %v808 = vmul.f32 %v718, %v768
    %v809 = vsel %vm789, 0.0, %v799
    %v810 = vsel %vm790, 0.0, %v800
    %v811 = vsel %vm791, 0.0, %v801
    %v812 = vsel %vm792, 0.0, %v802
    %v813 = vsel %vm793, 0.0, %v803
    %v814 = vsel %vm794, 0.0, %v804
    %v815 = vsel %vm795, 0.0, %v805
    %v816 = vsel %vm796, 0.0, %v806
    %v817 = vsel %vm797, 0.0, %v807
    %v818 = vsel %vm798, 0.0, %v808
    %v819 = vmul.f32 %v384, %v434
    %v820 = vmul.f32 %v385, %v435
    %v821 = vmul.f32 %v386, %v436
    %v822 = vmul.f32 %v387, %v437
    %v823 = vmul.f32 %v388, %v438
    %v824 = vmul.f32 %v389, %v439
    %v825 = vmul.f32 %v390, %v440
    %v826 = vmul.f32 %v391, %v441
    %v827 = vmul.f32 %v392, %v442
    %v828 = vmul.f32 %v393, %v443
    %829 = vrot.lane.b32.xlu0 %v227, 127
    %v830 = vpop.permute.xlu0 %829
    %831 = vrot.lane.b32.xlu0 %v228, 127
    %v832 = vpop.permute.xlu0 %831
    %833 = vrot.lane.b32.xlu0 %v229, 127
    %v834 = vpop.permute.xlu0 %833
    %835 = vrot.lane.b32.xlu0 %v230, 127
    %v836 = vpop.permute.xlu0 %835
    %837 = vrot.lane.b32.xlu0 %v231, 127
    %v838 = vpop.permute.xlu0 %837
    %v844 = vmul.f32 %v227, %v830
    %v845 = vmul.f32 %v228, %v832
    %v846 = vmul.f32 %v229, %v834
    %v847 = vmul.f32 %v230, %v836
    %v848 = vmul.f32 %v231, %v838
    %850 = vset.pattern.permute.xlu0 2
    %851 = vperm.xlu0 %850, %v844
    %v852 = vpop.permute.xlu0 %851
    %855 = vset.pattern.permute.xlu0 2
    %856 = vperm.xlu0 %855, %v845
    %v857 = vpop.permute.xlu0 %856
    %860 = vset.pattern.permute.xlu0 2
    %861 = vperm.xlu0 %860, %v846
    %v862 = vpop.permute.xlu0 %861
    %865 = vset.pattern.permute.xlu0 2
    %866 = vperm.xlu0 %865, %v847
    %v867 = vpop.permute.xlu0 %866
    %870 = vset.pattern.permute.xlu0 2
    %871 = vperm.xlu0 %870, %v848
    %v872 = vpop.permute.xlu0 %871
    %v874 = vadd.f32 %v819, %v852
    %v875 = vadd.f32 %v820, %v852
    %v876 = vadd.f32 %v821, %v857
    %v877 = vadd.f32 %v822, %v857
    %v878 = vadd.f32 %v823, %v862
    %v879 = vadd.f32 %v824, %v862
    %v880 = vadd.f32 %v825, %v867
    %v881 = vadd.f32 %v826, %v867
    %v882 = vadd.f32 %v827, %v872
    %v883 = vadd.f32 %v828, %v872
    %v884 = vsub.f32 %v874, %v809
    %v885 = vsub.f32 %v875, %v810
    %v886 = vsub.f32 %v876, %v811
    %v887 = vsub.f32 %v877, %v812
    %v888 = vsub.f32 %v878, %v813
    %v889 = vsub.f32 %v879, %v814
    %v890 = vsub.f32 %v880, %v815
    %v891 = vsub.f32 %v881, %v816
    %v892 = vsub.f32 %v882, %v817
    %v893 = vsub.f32 %v883, %v818
    %894 = vset.pattern.permute.xlu0 5
    %895 = vperm.xlu0 %894, %v227
    %v896 = vpop.permute.xlu0 %895
    %898 = vset.pattern.permute.xlu0 5
    %899 = vperm.xlu0 %898, %v228
    %v900 = vpop.permute.xlu0 %899
    %902 = vset.pattern.permute.xlu0 5
    %903 = vperm.xlu0 %902, %v229
    %v904 = vpop.permute.xlu0 %903
    %906 = vset.pattern.permute.xlu0 5
    %907 = vperm.xlu0 %906, %v230
    %v908 = vpop.permute.xlu0 %907
    %910 = vset.pattern.permute.xlu0 5
    %911 = vperm.xlu0 %910, %v231
    %v912 = vpop.permute.xlu0 %911
    %v914 = vsel %vm314, %v896, 0.5
    %v915 = vsel %vm315, %v896, 0.5
    %v916 = vsel %vm316, %v900, 0.5
    %v917 = vsel %vm317, %v900, 0.5
    %v918 = vsel %vm318, %v904, 0.5
    %v919 = vsel %vm319, %v904, 0.5
    %v920 = vsel %vm320, %v908, 0.5
    %v921 = vsel %vm321, %v908, 0.5
    %v922 = vsel %vm322, %v912, 0.5
    %v923 = vsel %vm323, %v912, 0.5
    %v924 = vsub.f32 %v137, %v914
    %v925 = vsub.f32 %v138, %v915
    %v926 = vsub.f32 %v139, %v916
    %v927 = vsub.f32 %v140, %v917
    %v928 = vsub.f32 %v141, %v918
    %v929 = vsub.f32 %v142, %v919
    %v930 = vsub.f32 %v143, %v920
    %v931 = vsub.f32 %v144, %v921
    %v932 = vsub.f32 %v145, %v922
    %v933 = vsub.f32 %v146, %v923
    %v934 = vmul.f32 %v924, %v924
    %v935 = vmul.f32 %v925, %v925
    %v936 = vmul.f32 %v926, %v926
    %v937 = vmul.f32 %v927, %v927
    %v938 = vmul.f32 %v928, %v928
    %v939 = vmul.f32 %v929, %v929
    %v940 = vmul.f32 %v930, %v930
    %v941 = vmul.f32 %v931, %v931
    %v942 = vmul.f32 %v932, %v932
    %v943 = vmul.f32 %v933, %v933
    %v944 = vadd.f32 %v934, %v935
    %v945 = vadd.f32 %v944, %v936
    %v946 = vadd.f32 %v945, %v937
    %v947 = vadd.f32 %v946, %v938
    %v948 = vadd.f32 %v947, %v939
    %v949 = vadd.f32 %v948, %v940
    %v950 = vadd.f32 %v949, %v941
    %v951 = vadd.f32 %v950, %v942
    %v952 = vadd.f32 %v951, %v943
    %953 = vadd.xlane.f32.xlu0 %v952
    %v954 = vpop.xlane.xlu0 %953
    %v955 = vrot.slane %v954, 4
    %v956 = vadd.f32 %v954, %v955
    %v957 = vrot.slane %v956, 2
    %v958 = vadd.f32 %v956, %v957
    %v959 = vrot.slane %v958, 1
    %v960 = vadd.f32 %v958, %v959
    %s961 = vtos %v960
    %962 = vset.pattern.permute.xlu0 6
    %963 = vperm.xlu0 %962, %v227
    %v964 = vpop.permute.xlu0 %963
    %966 = vset.pattern.permute.xlu0 6
    %967 = vperm.xlu0 %966, %v228
    %v968 = vpop.permute.xlu0 %967
    %970 = vset.pattern.permute.xlu0 6
    %971 = vperm.xlu0 %970, %v229
    %v972 = vpop.permute.xlu0 %971
    %974 = vset.pattern.permute.xlu0 6
    %975 = vperm.xlu0 %974, %v230
    %v976 = vpop.permute.xlu0 %975
    %978 = vset.pattern.permute.xlu0 6
    %979 = vperm.xlu0 %978, %v231
    %v980 = vpop.permute.xlu0 %979
    %v982 = vsel %vm314, %v964, 0.5
    %v983 = vsel %vm315, %v964, 0.5
    %v984 = vsel %vm316, %v968, 0.5
    %v985 = vsel %vm317, %v968, 0.5
    %v986 = vsel %vm318, %v972, 0.5
    %v987 = vsel %vm319, %v972, 0.5
    %v988 = vsel %vm320, %v976, 0.5
    %v989 = vsel %vm321, %v976, 0.5
    %v990 = vsel %vm322, %v980, 0.5
    %v991 = vsel %vm323, %v980, 0.5
    %v992 = vsub.f32 %v177, %v982
    %v993 = vsub.f32 %v178, %v983
    %v994 = vsub.f32 %v179, %v984
    %v995 = vsub.f32 %v180, %v985
    %v996 = vsub.f32 %v181, %v986
    %v997 = vsub.f32 %v182, %v987
    %v998 = vsub.f32 %v183, %v988
    %v999 = vsub.f32 %v184, %v989
    %v1000 = vsub.f32 %v185, %v990
    %v1001 = vsub.f32 %v186, %v991
    %v1002 = vmul.f32 %v992, %v992
    %v1003 = vmul.f32 %v993, %v993
    %v1004 = vmul.f32 %v994, %v994
    %v1005 = vmul.f32 %v995, %v995
    %v1006 = vmul.f32 %v996, %v996
    %v1007 = vmul.f32 %v997, %v997
    %v1008 = vmul.f32 %v998, %v998
    %v1009 = vmul.f32 %v999, %v999
    %v1010 = vmul.f32 %v1000, %v1000
    %v1011 = vmul.f32 %v1001, %v1001
    %v1012 = vadd.f32 %v1002, %v1003
    %v1013 = vadd.f32 %v1012, %v1004
    %v1014 = vadd.f32 %v1013, %v1005
    %v1015 = vadd.f32 %v1014, %v1006
    %v1016 = vadd.f32 %v1015, %v1007
    %v1017 = vadd.f32 %v1016, %v1008
    %v1018 = vadd.f32 %v1017, %v1009
    %v1019 = vadd.f32 %v1018, %v1010
    %v1020 = vadd.f32 %v1019, %v1011
    %1021 = vadd.xlane.f32.xlu0 %v1020
    %v1022 = vpop.xlane.xlu0 %1021
    %v1023 = vrot.slane %v1022, 4
    %v1024 = vadd.f32 %v1022, %v1023
    %v1025 = vrot.slane %v1024, 2
    %v1026 = vadd.f32 %v1024, %v1025
    %v1027 = vrot.slane %v1026, 1
    %v1028 = vadd.f32 %v1026, %v1027
    %s1029 = vtos %v1028
    %1030 = vset.pattern.permute.xlu0 7
    %1031 = vperm.xlu0 %1030, %v227
    %v1032 = vpop.permute.xlu0 %1031
    %1034 = vset.pattern.permute.xlu0 7
    %1035 = vperm.xlu0 %1034, %v228
    %v1036 = vpop.permute.xlu0 %1035
    %1038 = vset.pattern.permute.xlu0 7
    %1039 = vperm.xlu0 %1038, %v229
    %v1040 = vpop.permute.xlu0 %1039
    %1042 = vset.pattern.permute.xlu0 7
    %1043 = vperm.xlu0 %1042, %v230
    %v1044 = vpop.permute.xlu0 %1043
    %1046 = vset.pattern.permute.xlu0 7
    %1047 = vperm.xlu0 %1046, %v231
    %v1048 = vpop.permute.xlu0 %1047
    %v1050 = vsel %vm314, %v1032, 0.0
    %v1051 = vsel %vm315, %v1032, 0.0
    %v1052 = vsel %vm316, %v1036, 0.0
    %v1053 = vsel %vm317, %v1036, 0.0
    %v1054 = vsel %vm318, %v1040, 0.0
    %v1055 = vsel %vm319, %v1040, 0.0
    %v1056 = vsel %vm320, %v1044, 0.0
    %v1057 = vsel %vm321, %v1044, 0.0
    %v1058 = vsel %vm322, %v1048, 0.0
    %v1059 = vsel %vm323, %v1048, 0.0
    %v1060 = vsub.f32 %v77, %v1050
    %v1061 = vsub.f32 %v78, %v1051
    %v1062 = vsub.f32 %v79, %v1052
    %v1063 = vsub.f32 %v80, %v1053
    %v1064 = vsub.f32 %v81, %v1054
    %v1065 = vsub.f32 %v82, %v1055
    %v1066 = vsub.f32 %v83, %v1056
    %v1067 = vsub.f32 %v84, %v1057
    %v1068 = vsub.f32 %v85, %v1058
    %v1069 = vsub.f32 %v86, %v1059
    %v1070 = vmul.f32 %v1060, %v1060
    %v1071 = vmul.f32 %v1061, %v1061
    %v1072 = vmul.f32 %v1062, %v1062
    %v1073 = vmul.f32 %v1063, %v1063
    %v1074 = vmul.f32 %v1064, %v1064
    %v1075 = vmul.f32 %v1065, %v1065
    %v1076 = vmul.f32 %v1066, %v1066
    %v1077 = vmul.f32 %v1067, %v1067
    %v1078 = vmul.f32 %v1068, %v1068
    %v1079 = vmul.f32 %v1069, %v1069
    %v1080 = vadd.f32 %v1070, %v1071
    %v1081 = vadd.f32 %v1080, %v1072
    %v1082 = vadd.f32 %v1081, %v1073
    %v1083 = vadd.f32 %v1082, %v1074
    %v1084 = vadd.f32 %v1083, %v1075
    %v1085 = vadd.f32 %v1084, %v1076
    %v1086 = vadd.f32 %v1085, %v1077
    %v1087 = vadd.f32 %v1086, %v1078
    %v1088 = vadd.f32 %v1087, %v1079
    %1089 = vadd.xlane.f32.xlu0 %v1088
    %v1090 = vpop.xlane.xlu0 %1089
    %v1091 = vrot.slane %v1090, 4
    %v1092 = vadd.f32 %v1090, %v1091
    %v1093 = vrot.slane %v1092, 2
    %v1094 = vadd.f32 %v1092, %v1093
    %v1095 = vrot.slane %v1094, 1
    %v1096 = vadd.f32 %v1094, %v1095
    %s1097 = vtos %v1096
    %1098 = vset.pattern.permute.xlu0 8
    %1099 = vperm.xlu0 %1098, %v227
    %v1100 = vpop.permute.xlu0 %1099
    %1102 = vset.pattern.permute.xlu0 8
    %1103 = vperm.xlu0 %1102, %v228
    %v1104 = vpop.permute.xlu0 %1103
    %1106 = vset.pattern.permute.xlu0 8
    %1107 = vperm.xlu0 %1106, %v229
    %v1108 = vpop.permute.xlu0 %1107
    %1110 = vset.pattern.permute.xlu0 8
    %1111 = vperm.xlu0 %1110, %v230
    %v1112 = vpop.permute.xlu0 %1111
    %1114 = vset.pattern.permute.xlu0 8
    %1115 = vperm.xlu0 %1114, %v231
    %v1116 = vpop.permute.xlu0 %1115
    %v1118 = vsel %vm314, %v1100, 0.0
    %v1119 = vsel %vm315, %v1100, 0.0
    %v1120 = vsel %vm316, %v1104, 0.0
    %v1121 = vsel %vm317, %v1104, 0.0
    %v1122 = vsel %vm318, %v1108, 0.0
    %v1123 = vsel %vm319, %v1108, 0.0
    %v1124 = vsel %vm320, %v1112, 0.0
    %v1125 = vsel %vm321, %v1112, 0.0
    %v1126 = vsel %vm322, %v1116, 0.0
    %v1127 = vsel %vm323, %v1116, 0.0
    %v1128 = vsub.f32 %v87, %v1118
    %v1129 = vsub.f32 %v88, %v1119
    %v1130 = vsub.f32 %v89, %v1120
    %v1131 = vsub.f32 %v90, %v1121
    %v1132 = vsub.f32 %v91, %v1122
    %v1133 = vsub.f32 %v92, %v1123
    %v1134 = vsub.f32 %v93, %v1124
    %v1135 = vsub.f32 %v94, %v1125
    %v1136 = vsub.f32 %v95, %v1126
    %v1137 = vsub.f32 %v96, %v1127
    %v1138 = vmul.f32 %v1128, %v1128
    %v1139 = vmul.f32 %v1129, %v1129
    %v1140 = vmul.f32 %v1130, %v1130
    %v1141 = vmul.f32 %v1131, %v1131
    %v1142 = vmul.f32 %v1132, %v1132
    %v1143 = vmul.f32 %v1133, %v1133
    %v1144 = vmul.f32 %v1134, %v1134
    %v1145 = vmul.f32 %v1135, %v1135
    %v1146 = vmul.f32 %v1136, %v1136
    %v1147 = vmul.f32 %v1137, %v1137
    %v1148 = vadd.f32 %v1138, %v1139
    %v1149 = vadd.f32 %v1148, %v1140
    %v1150 = vadd.f32 %v1149, %v1141
    %v1151 = vadd.f32 %v1150, %v1142
    %v1152 = vadd.f32 %v1151, %v1143
    %v1153 = vadd.f32 %v1152, %v1144
    %v1154 = vadd.f32 %v1153, %v1145
    %v1155 = vadd.f32 %v1154, %v1146
    %v1156 = vadd.f32 %v1155, %v1147
    %1157 = vadd.xlane.f32.xlu0 %v1156
    %v1158 = vpop.xlane.xlu0 %1157
    %v1159 = vrot.slane %v1158, 4
    %v1160 = vadd.f32 %v1158, %v1159
    %v1161 = vrot.slane %v1160, 2
    %v1162 = vadd.f32 %v1160, %v1161
    %v1163 = vrot.slane %v1162, 1
    %v1164 = vadd.f32 %v1162, %v1163
    %s1165 = vtos %v1164
    %1166 = vset.pattern.permute.xlu0 13
    %1167 = vperm.xlu0 %1166, %v289
    %v1168 = vpop.permute.xlu0 %1167
    %1169 = vset.pattern.permute.xlu0 13
    %1170 = vperm.xlu0 %1169, %v290
    %v1171 = vpop.permute.xlu0 %1170
    %1172 = vset.pattern.permute.xlu0 13
    %1173 = vperm.xlu0 %1172, %v291
    %v1174 = vpop.permute.xlu0 %1173
    %1175 = vset.pattern.permute.xlu0 13
    %1176 = vperm.xlu0 %1175, %v292
    %v1177 = vpop.permute.xlu0 %1176
    %1178 = vset.pattern.permute.xlu0 13
    %1179 = vperm.xlu0 %1178, %v293
    %v1180 = vpop.permute.xlu0 %1179
    %vm1181 = vcmp.eq.s32.totalorder %v1168, 1
    %vm1182 = vcmp.eq.s32.totalorder %v1171, 1
    %vm1183 = vcmp.eq.s32.totalorder %v1174, 1
    %vm1184 = vcmp.eq.s32.totalorder %v1177, 1
    %vm1185 = vcmp.eq.s32.totalorder %v1180, 1
    %vm1186 = vmand %vm252, %vm1181
    %vm1187 = vmand %vm253, %vm1181
    %vm1188 = vmand %vm252, %vm1182
    %vm1189 = vmand %vm253, %vm1182
    %vm1190 = vmand %vm252, %vm1183
    %vm1191 = vmand %vm253, %vm1183
    %vm1192 = vmand %vm252, %vm1184
    %vm1193 = vmand %vm253, %vm1184
    %vm1194 = vmand %vm252, %vm1185
    %vm1195 = vmand %vm253, %vm1185
    %v1196 = vmul.f32 %v884, 0.6
    %v1197 = vmul.f32 %v885, 0.6
    %v1198 = vmul.f32 %v886, 0.6
    %v1199 = vmul.f32 %v887, 0.6
    %v1200 = vmul.f32 %v888, 0.6
    %v1201 = vmul.f32 %v889, 0.6
    %v1202 = vmul.f32 %v890, 0.6
    %v1203 = vmul.f32 %v891, 0.6
    %v1204 = vmul.f32 %v892, 0.6
    %v1205 = vmul.f32 %v893, 0.6
    %vm1206 = vcmp.gt.f32.partialorder %v809, %v1196
    %vm1207 = vcmp.gt.f32.partialorder %v810, %v1197
    %vm1208 = vcmp.gt.f32.partialorder %v811, %v1198
    %vm1209 = vcmp.gt.f32.partialorder %v812, %v1199
    %vm1210 = vcmp.gt.f32.partialorder %v813, %v1200
    %vm1211 = vcmp.gt.f32.partialorder %v814, %v1201
    %vm1212 = vcmp.gt.f32.partialorder %v815, %v1202
    %vm1213 = vcmp.gt.f32.partialorder %v816, %v1203
    %vm1214 = vcmp.gt.f32.partialorder %v817, %v1204
    %vm1215 = vcmp.gt.f32.partialorder %v818, %v1205
    %vm1216 = vmxor %vm1206, 1
    %vm1217 = vmxor %vm1207, 1
    %vm1218 = vmxor %vm1208, 1
    %vm1219 = vmxor %vm1209, 1
    %vm1220 = vmxor %vm1210, 1
    %vm1221 = vmxor %vm1211, 1
    %vm1222 = vmxor %vm1212, 1
    %vm1223 = vmxor %vm1213, 1
    %vm1224 = vmxor %vm1214, 1
    %vm1225 = vmxor %vm1215, 1
    %vm1226 = vmand %vm1186, %vm1216
    %vm1227 = vmand %vm1187, %vm1217
    %vm1228 = vmand %vm1188, %vm1218
    %vm1229 = vmand %vm1189, %vm1219
    %vm1230 = vmand %vm1190, %vm1220
    %vm1231 = vmand %vm1191, %vm1221
    %vm1232 = vmand %vm1192, %vm1222
    %vm1233 = vmand %vm1193, %vm1223
    %vm1234 = vmand %vm1194, %vm1224
    %vm1235 = vmand %vm1195, %vm1225
    %vm1236 = vmxor %vm314, 1
    %vm1237 = vmxor %vm315, 1
    %vm1238 = vmxor %vm316, 1
    %vm1239 = vmxor %vm317, 1
    %vm1240 = vmxor %vm318, 1
    %vm1241 = vmxor %vm319, 1
    %vm1242 = vmxor %vm320, 1
    %vm1243 = vmxor %vm321, 1
    %vm1244 = vmxor %vm322, 1
    %vm1245 = vmxor %vm323, 1
    %vm1246 = vmand %vm1226, %vm1236
    %vm1247 = vmand %vm1227, %vm1237
    %vm1248 = vmand %vm1228, %vm1238
    %vm1249 = vmand %vm1229, %vm1239
    %vm1250 = vmand %vm1230, %vm1240
    %vm1251 = vmand %vm1231, %vm1241
    %vm1252 = vmand %vm1232, %vm1242
    %vm1253 = vmand %vm1233, %vm1243
    %vm1254 = vmand %vm1234, %vm1244
    %vm1255 = vmand %vm1235, %vm1245
    %v1256 = vmul.f32 %v217, %v217
    %v1257 = vmul.f32 %v218, %v218
    %v1258 = vmul.f32 %v219, %v219
    %v1259 = vmul.f32 %v220, %v220
    %v1260 = vmul.f32 %v221, %v221
    %v1261 = vmul.f32 %v222, %v222
    %v1262 = vmul.f32 %v223, %v223
    %v1263 = vmul.f32 %v224, %v224
    %v1264 = vmul.f32 %v225, %v225
    %v1265 = vmul.f32 %v226, %v226
    %v1266 = vsel %vm1246, %v1256, 0.0
    %v1267 = vsel %vm1247, %v1257, 0.0
    %v1268 = vsel %vm1248, %v1258, 0.0
    %v1269 = vsel %vm1249, %v1259, 0.0
    %v1270 = vsel %vm1250, %v1260, 0.0
    %v1271 = vsel %vm1251, %v1261, 0.0
    %v1272 = vsel %vm1252, %v1262, 0.0
    %v1273 = vsel %vm1253, %v1263, 0.0
    %v1274 = vsel %vm1254, %v1264, 0.0
    %v1275 = vsel %vm1255, %v1265, 0.0
    %v1276 = vadd.f32 %v1266, %v1267
    %v1277 = vadd.f32 %v1276, %v1268
    %v1278 = vadd.f32 %v1277, %v1269
    %v1279 = vadd.f32 %v1278, %v1270
    %v1280 = vadd.f32 %v1279, %v1271
    %v1281 = vadd.f32 %v1280, %v1272
    %v1282 = vadd.f32 %v1281, %v1273
    %v1283 = vadd.f32 %v1282, %v1274
    %v1284 = vadd.f32 %v1283, %v1275
    %1285 = vadd.xlane.f32.xlu0 %v1284
    %v1286 = vpop.xlane.xlu0 %1285
    %v1287 = vrot.slane %v1286, 4
    %v1288 = vadd.f32 %v1286, %v1287
    %v1289 = vrot.slane %v1288, 2
    %v1290 = vadd.f32 %v1288, %v1289
    %v1291 = vrot.slane %v1290, 1
    %v1292 = vadd.f32 %v1290, %v1291
    %s1293 = vtos %v1292
    %v1294 = vmul.f32 %v217, %v884
    %v1295 = vmul.f32 %v218, %v885
    %v1296 = vmul.f32 %v219, %v886
    %v1297 = vmul.f32 %v220, %v887
    %v1298 = vmul.f32 %v221, %v888
    %v1299 = vmul.f32 %v222, %v889
    %v1300 = vmul.f32 %v223, %v890
    %v1301 = vmul.f32 %v224, %v891
    %v1302 = vmul.f32 %v225, %v892
    %v1303 = vmul.f32 %v226, %v893
    %v1304 = vsub.f32 %v1294, %v809
    %v1305 = vsub.f32 %v1295, %v810
    %v1306 = vsub.f32 %v1296, %v811
    %v1307 = vsub.f32 %v1297, %v812
    %v1308 = vsub.f32 %v1298, %v813
    %v1309 = vsub.f32 %v1299, %v814
    %v1310 = vsub.f32 %v1300, %v815
    %v1311 = vsub.f32 %v1301, %v816
    %v1312 = vsub.f32 %v1302, %v817
    %v1313 = vsub.f32 %v1303, %v818
    %v1314 = vsel %vm314, %v1304, 0.0
    %v1315 = vsel %vm315, %v1305, 0.0
    %v1316 = vsel %vm316, %v1306, 0.0
    %v1317 = vsel %vm317, %v1307, 0.0
    %v1318 = vsel %vm318, %v1308, 0.0
    %v1319 = vsel %vm319, %v1309, 0.0
    %v1320 = vsel %vm320, %v1310, 0.0
    %v1321 = vsel %vm321, %v1311, 0.0
    %v1322 = vsel %vm322, %v1312, 0.0
    %v1323 = vsel %vm323, %v1313, 0.0
    %v1324 = vadd.f32 %v1314, %v1315
    %1325 = vadd.xlane.f32.xlu0 %v1324
    %v1326 = vpop.xlane.xlu0 %1325
    %v1327 = vadd.f32 %v1316, %v1317
    %1328 = vadd.xlane.f32.xlu0 %v1327
    %v1329 = vpop.xlane.xlu0 %1328
    %v1330 = vadd.f32 %v1318, %v1319
    %1331 = vadd.xlane.f32.xlu0 %v1330
    %v1332 = vpop.xlane.xlu0 %1331
    %v1333 = vadd.f32 %v1320, %v1321
    %1334 = vadd.xlane.f32.xlu0 %v1333
    %v1335 = vpop.xlane.xlu0 %1334
    %v1336 = vadd.f32 %v1322, %v1323
    %1337 = vadd.xlane.f32.xlu0 %v1336
    %v1338 = vpop.xlane.xlu0 %1337
    %v1339 = vsel %vm314, %v884, 0.0
    %v1340 = vsel %vm315, %v885, 0.0
    %v1341 = vsel %vm316, %v886, 0.0
    %v1342 = vsel %vm317, %v887, 0.0
    %v1343 = vsel %vm318, %v888, 0.0
    %v1344 = vsel %vm319, %v889, 0.0
    %v1345 = vsel %vm320, %v890, 0.0
    %v1346 = vsel %vm321, %v891, 0.0
    %v1347 = vsel %vm322, %v892, 0.0
    %v1348 = vsel %vm323, %v893, 0.0
    %v1349 = vadd.f32 %v1339, %v1340
    %1350 = vadd.xlane.f32.xlu0 %v1349
    %v1351 = vpop.xlane.xlu0 %1350
    %v1352 = vadd.f32 %v1341, %v1342
    %1353 = vadd.xlane.f32.xlu0 %v1352
    %v1354 = vpop.xlane.xlu0 %1353
    %v1355 = vadd.f32 %v1343, %v1344
    %1356 = vadd.xlane.f32.xlu0 %v1355
    %v1357 = vpop.xlane.xlu0 %1356
    %v1358 = vadd.f32 %v1345, %v1346
    %1359 = vadd.xlane.f32.xlu0 %v1358
    %v1360 = vpop.xlane.xlu0 %1359
    %v1361 = vadd.f32 %v1347, %v1348
    %1362 = vadd.xlane.f32.xlu0 %v1361
    %v1363 = vpop.xlane.xlu0 %1362
    %v1364 = vsel %vm232, %v1351, 1.0
    %v1365 = vsel %vm233, %v1354, 1.0
    %v1366 = vsel %vm234, %v1357, 1.0
    %v1367 = vsel %vm235, %v1360, 1.0
    %v1368 = vsel %vm236, %v1363, 1.0
    %v1369 = vrcp.pop %v1364
    %v1370 = vmul.f32 %v1364, %v1369
    %v1371 = vsub.f32 1.0, %v1370
    %v1372 = vmul.f32 %v1369, %v1371
    %v1373 = vadd.f32 %v1369, %v1372
    %vm1374 = vweird.f32 %v1364
    %vm1375 = vweird.f32 %v1369
    %vm1376 = vmor %vm1374, %vm1375
    %v1377 = vsel %vm1376, %v1369, %v1373
    %v1378 = vand.u32 2147483647, %v1364
    %vm1379 = vcmp.eq.f32.partialorder %v1378, 8.507059e+37
    %v1380 = vand.u32 %v1364, 2147483648
    %v1381 = vor.u32 1.1754944e-38, %v1380
    %v1382 = vsel %vm1379, %v1381, %v1377
    %v1383 = vmul.f32 %v1326, %v1382
    %v1384 = vrcp.pop %v1365
    %v1385 = vmul.f32 %v1365, %v1384
    %v1386 = vsub.f32 1.0, %v1385
    %v1387 = vmul.f32 %v1384, %v1386
    %v1388 = vadd.f32 %v1384, %v1387
    %vm1389 = vweird.f32 %v1365
    %vm1390 = vweird.f32 %v1384
    %vm1391 = vmor %vm1389, %vm1390
    %v1392 = vsel %vm1391, %v1384, %v1388
    %v1393 = vand.u32 2147483647, %v1365
    %vm1394 = vcmp.eq.f32.partialorder %v1393, 8.507059e+37
    %v1395 = vand.u32 %v1365, 2147483648
    %v1396 = vor.u32 1.1754944e-38, %v1395
    %v1397 = vsel %vm1394, %v1396, %v1392
    %v1398 = vmul.f32 %v1329, %v1397
    %v1399 = vrcp.pop %v1366
    %v1400 = vmul.f32 %v1366, %v1399
    %v1401 = vsub.f32 1.0, %v1400
    %v1402 = vmul.f32 %v1399, %v1401
    %v1403 = vadd.f32 %v1399, %v1402
    %vm1404 = vweird.f32 %v1366
    %vm1405 = vweird.f32 %v1399
    %vm1406 = vmor %vm1404, %vm1405
    %v1407 = vsel %vm1406, %v1399, %v1403
    %v1408 = vand.u32 2147483647, %v1366
    %vm1409 = vcmp.eq.f32.partialorder %v1408, 8.507059e+37
    %v1410 = vand.u32 %v1366, 2147483648
    %v1411 = vor.u32 1.1754944e-38, %v1410
    %v1412 = vsel %vm1409, %v1411, %v1407
    %v1413 = vmul.f32 %v1332, %v1412
    %v1414 = vrcp.pop %v1367
    %v1415 = vmul.f32 %v1367, %v1414
    %v1416 = vsub.f32 1.0, %v1415
    %v1417 = vmul.f32 %v1414, %v1416
    %v1418 = vadd.f32 %v1414, %v1417
    %vm1419 = vweird.f32 %v1367
    %vm1420 = vweird.f32 %v1414
    %vm1421 = vmor %vm1419, %vm1420
    %v1422 = vsel %vm1421, %v1414, %v1418
    %v1423 = vand.u32 2147483647, %v1367
    %vm1424 = vcmp.eq.f32.partialorder %v1423, 8.507059e+37
    %v1425 = vand.u32 %v1367, 2147483648
    %v1426 = vor.u32 1.1754944e-38, %v1425
    %v1427 = vsel %vm1424, %v1426, %v1422
    %v1428 = vmul.f32 %v1335, %v1427
    %v1429 = vrcp.pop %v1368
    %v1430 = vmul.f32 %v1368, %v1429
    %v1431 = vsub.f32 1.0, %v1430
    %v1432 = vmul.f32 %v1429, %v1431
    %v1433 = vadd.f32 %v1429, %v1432
    %vm1434 = vweird.f32 %v1368
    %vm1435 = vweird.f32 %v1429
    %vm1436 = vmor %vm1434, %vm1435
    %v1437 = vsel %vm1436, %v1429, %v1433
    %v1438 = vand.u32 2147483647, %v1368
    %vm1439 = vcmp.eq.f32.partialorder %v1438, 8.507059e+37
    %v1440 = vand.u32 %v1368, 2147483648
    %v1441 = vor.u32 1.1754944e-38, %v1440
    %v1442 = vsel %vm1439, %v1441, %v1437
    %v1443 = vmul.f32 %v1338, %v1442
    %v1444 = vmul.f32 %v1383, %v1383
    %v1445 = vmul.f32 %v1398, %v1398
    %v1446 = vmul.f32 %v1413, %v1413
    %v1447 = vmul.f32 %v1428, %v1428
    %v1448 = vmul.f32 %v1443, %v1443
    %v1449 = vsel %vm232, %v1444, 0.0
    %v1450 = vsel %vm233, %v1445, 0.0
    %v1451 = vsel %vm234, %v1446, 0.0
    %v1452 = vsel %vm235, %v1447, 0.0
    %v1453 = vsel %vm236, %v1448, 0.0
    %1459 = vrot.lane.b32.xlu0 %v1449, 117
    %v1460 = vpop.permute.xlu0 %1459
    %1461 = vrot.lane.b32.xlu0 %v1450, 117
    %v1462 = vpop.permute.xlu0 %1461
    %1463 = vrot.lane.b32.xlu0 %v1451, 117
    %v1464 = vpop.permute.xlu0 %1463
    %1465 = vrot.lane.b32.xlu0 %v1452, 117
    %v1466 = vpop.permute.xlu0 %1465
    %1467 = vrot.lane.b32.xlu0 %v1453, 117
    %v1468 = vpop.permute.xlu0 %1467
    %vm1474 = vcmask 7168
    %v1475 = vsel %vm1474, %v1460, 0.0
    %v1476 = vsel %vm1474, %v1462, 0.0
    %v1477 = vadd.f32 %v1475, %v1476
    %v1478 = vsel %vm1474, %v1464, 0.0
    %v1479 = vadd.f32 %v1477, %v1478
    %v1480 = vsel %vm1474, %v1466, 0.0
    %v1481 = vadd.f32 %v1479, %v1480
    %v1482 = vsel %vm1474, %v1468, 0.0
    %v1483 = vadd.f32 %v1481, %v1482
    %1484 = vadd.xlane.f32.xlu0 %v1483
    %v1485 = vpop.xlane.xlu0 %1484
    %v1486 = vrot.slane %v1485, 4
    %v1487 = vadd.f32 %v1485, %v1486
    %v1488 = vrot.slane %v1487, 2
    %v1489 = vadd.f32 %v1487, %v1488
    %v1490 = vrot.slane %v1489, 1
    %v1491 = vadd.f32 %v1489, %v1490
    %s1492 = vtos %v1491
    %s1493 = smul.f32 %s1492, 5.0
    %s1494 = sadd.f32 %s1293, %s1493
    %1495 = vrot.lane.b32.xlu0 %v227, 116
    %v1496 = vpop.permute.xlu0 %1495
    %1497 = vrot.lane.b32.xlu0 %v228, 116
    %v1498 = vpop.permute.xlu0 %1497
    %1499 = vrot.lane.b32.xlu0 %v229, 116
    %v1500 = vpop.permute.xlu0 %1499
    %1501 = vrot.lane.b32.xlu0 %v230, 116
    %v1502 = vpop.permute.xlu0 %1501
    %1503 = vrot.lane.b32.xlu0 %v231, 116
    %v1504 = vpop.permute.xlu0 %1503
    %v1510 = vsel %vm1474, %v1496, 0.0
    %v1511 = vsel %vm1474, %v1498, 0.0
    %v1512 = vadd.f32 %v1510, %v1511
    %v1513 = vsel %vm1474, %v1500, 0.0
    %v1514 = vadd.f32 %v1512, %v1513
    %v1515 = vsel %vm1474, %v1502, 0.0
    %v1516 = vadd.f32 %v1514, %v1515
    %v1517 = vsel %vm1474, %v1504, 0.0
    %v1518 = vadd.f32 %v1516, %v1517
    %1519 = vadd.xlane.f32.xlu0 %v1518
    %v1520 = vpop.xlane.xlu0 %1519
    %v1521 = vrot.slane %v1520, 4
    %v1522 = vadd.f32 %v1520, %v1521
    %v1523 = vrot.slane %v1522, 2
    %v1524 = vadd.f32 %v1522, %v1523
    %v1525 = vrot.slane %v1524, 1
    %v1526 = vadd.f32 %v1524, %v1525
    %s1527 = vtos %v1526
    %vm1528 = vcmp.eq.s32.totalorder %v238, 0
    %v1529 = vstv %s961
    %v1530 = vsel %vm1528, %v1529, 0.0
    %vm1531 = vcmp.eq.s32.totalorder %v238, 1
    %v1532 = vstv %s1029
    %v1533 = vsel %vm1531, %v1532, 0.0
    %v1534 = vadd.f32 %v1530, %v1533
    %vm1535 = vcmp.eq.s32.totalorder %v238, 2
    %v1536 = vstv %s1097
    %v1537 = vsel %vm1535, %v1536, 0.0
    %v1538 = vadd.f32 %v1534, %v1537
    %vm1539 = vcmp.eq.s32.totalorder %v238, 3
    %v1540 = vstv %s1165
    %v1541 = vsel %vm1539, %v1540, 0.0
    %v1542 = vadd.f32 %v1538, %v1541
    %vm1543 = vcmp.eq.s32.totalorder %v238, 4
    %v1544 = vstv %s1494
    %v1545 = vsel %vm1543, %v1544, 0.0
    %v1546 = vadd.f32 %v1542, %v1545
    %vm1547 = vcmp.eq.s32.totalorder %v238, 5
    %v1548 = vstv %s1527
    %v1549 = vsel %vm1547, %v1548, 0.0
    %v1550 = vadd.f32 %v1546, %v1549
    %p1551 = scmp.eq.s32.totalorder 0, 0
    // Predicated region
    $region14: #{tpu_custom_call.1} parent=1 // pred_check
      %p1552 = pneg %p1551
    $region15: #{tpu_custom_call.1} parent=1 // pred_check_branch
      %1554 = sbr.rel (%p1552) target = $region17
    $region16: #{tpu_custom_call.1} parent=1 // pred_region
      %1555 = vst [vmem:[#allocation5] sm:$0x1] %v1550
    $region17: #{tpu_custom_call.1} parent=1 // pred_fallthru
      _
    %p1556 = scmp.ne.s32.totalorder 0, 0
    // Predicated region
    $region18: #{tpu_custom_call.1} parent=1 // pred_check
      %p1557 = pneg %p1556
    $region19: #{tpu_custom_call.1} parent=1 // pred_check_branch
      %1559 = sbr.rel (%p1557) target = $region21
    $region20: #{tpu_custom_call.1} parent=1 // pred_region
      %v1560 = vld [vmem:[#allocation5] sm:$0x1]
      %v1561 = vadd.f32 %v1560, %v1550
      %1562 = vst [vmem:[#allocation5] sm:$0x1] %v1561
    $region21: #{tpu_custom_call.1} parent=1 // pred_fallthru
      _
    // Predicated region
    $region22: #{tpu_custom_call.1} parent=1 // pred_check
      _
    $region23: #{tpu_custom_call.1} parent=1 // pred_check_branch
      %1564 = sbr.rel (0) target = $region25
    $region24: #{tpu_custom_call.1} parent=1 // pred_region
      %1566 = vsyncadd [#allocation4], 0
      %s1568 = sshll.u32 [#allocation5], 4
      %s1569 = int_to_ptr.vmem [resolvable:$true] %s1568
      %s1570 = sshll.u32 %s2, 4
      %s1571 = int_to_ptr.hbm [resolvable:$true] %s1570
      %1573 = dma.vmem_to_hbm [thread:$0]  %s1569, 16, %s1571, [#allocation4]
    $region25: #{tpu_custom_call.1} parent=1 // pred_fallthru
      _
    // Predicated region
    $region26: #{tpu_custom_call.1} parent=1 // pred_check
      _
    $region27: #{tpu_custom_call.1} parent=1 // pred_check_branch
      %1575 = sbr.rel (0) target = $region29
    $region28: #{tpu_custom_call.1} parent=1 // pred_region
      %1577 = dma.done [#allocation4], 16
    $region29: #{tpu_custom_call.1} parent=1 // pred_fallthru
      _
    %1578 = vsyncpa [#allocation3], 1
    %1579 = vsyncpa [#allocation4], 1

</llo_original>
